<compile_context>
chip_gen: v5e
topology: v5e:2x2
jax: 0.10.0
libtpu: 0.0.40
codegen_flags: <defaults>
</compile_context>

<pallas_src>
import functools
from math import log

import jax
import jax.numpy as jnp
import numpy as np
from jax.experimental import pallas as pl
from jax.experimental.pallas import tpu as pltpu


def _efm_kernel(c_ref, a_ref, w_ref, b_ref, m_ref, msk_ref, out_ref,
                xg_ref, col_ref, *, H, W, C, B):
    # c_ref, a_ref : (B, C, R)        bf16 unpadded flattened activations, R=H*W
    # w_ref        : (C, 9*C)         bf16 stacked-K conv weight (BN scale folded)
    # b_ref        : (C, 1)           f32 folded (inference) BatchNorm bias
    # m_ref        : (C, C)           f32 banded Conv1d-over-channels matrix (transposed)
    # msk_ref      : (2, R)           bf16 column masks for the dx=-1 / dx=+1 taps
    # out_ref      : (B, C, R)        f32 output
    # xg_ref       : (C, R + 2*(W+1)) bf16 guarded x slab (vertical zero padding)
    # col_ref      : (9*C, B*R)       bf16 im2col slab
    R = H * W
    G = W + 1                          # zero-guard width on each side of the slab
    inv_hw = 1.0 / float(R)

    # The guard lanes provide the "row -1 / row H" zero padding of the 3x3 conv;
    # they are never overwritten, so zeroing them once per step is enough.
    xg_ref[:, :G] = jnp.zeros((C, G), xg_ref.dtype)
    xg_ref[:, G + R:] = jnp.zeros((C, G), xg_ref.dtype)

    taps = [(dy, dx) for dy in (-1, 0, 1) for dx in (-1, 0, 1)]

    # ---- build the im2col slab for all B images -----------------------------
    for b in range(B):
        cb = c_ref[b].astype(jnp.float32)
        ab = a_ref[b].astype(jnp.float32)
        # x = c*att + c  (f32 math: v5e's VPU has no bf16 path), bf16 for the MXU.
        xg_ref[:, G:G + R] = (cb * ab + cb).astype(xg_ref.dtype)

        # Every tap is a contiguous lane-shifted slice of the guarded slab; the
        # dx=+-1 taps additionally zero the column that wrapped across a row.
        for t, (dy, dx) in enumerate(taps):
            base = G + dy * W + dx                      # always >= 0
            slab = xg_ref[:, base:base + R]             # (C, R)
            if dx == -1:
                slab = slab * msk_ref[0:1, :]
            elif dx == 1:
                slab = slab * msk_ref[1:2, :]
            col_ref[t * C:(t + 1) * C, b * R:(b + 1) * R] = slab

    # ---- one stacked-K matmul on the MXU, f32 accumulation ------------------
    acc = jnp.dot(w_ref[...], col_ref[...], preferred_element_type=jnp.float32)
    # folded BatchNorm bias + ReLU, kept in f32 (cheap on v5e's f32-only VPU).
    y = jnp.maximum(acc + b_ref[...], 0.0)              # (C, B*R)

    # ---- per-image channel attention + rescale -------------------------------
    for b in range(B):
        yb = y[:, b * R:(b + 1) * R]
        # AdaptiveAvgPool2d(1): exact mean (no garbage lanes in this layout).
        pooled = jnp.sum(yb, axis=1, keepdims=True) * inv_hw            # (C, 1)
        # Conv1d(1,1,k) over channels as a tiny banded (C,C) matmul, then sigmoid.
        wei = jax.nn.sigmoid(jnp.dot(m_ref[...], pooled,
                                     preferred_element_type=jnp.float32))  # (C, 1)
        # Lane-dense store of the rescaled feature map.
        out_ref[b] = (yb * wei).astype(out_ref.dtype)


def efm_forward(c_nchw, att_nchw, params, *, images_per_step=None):
    """EFM forward. Inputs are NCHW float32 (PyTorch convention)."""
    N, C, H, W = c_nchw.shape
    if att_nchw.shape[2:] != (H, W):
        # F.interpolate(..., mode='bilinear', align_corners=False) equivalent (glue).
        att_nchw = jax.image.resize(
            att_nchw, (att_nchw.shape[0], att_nchw.shape[1], H, W), method="bilinear")

    R = H * W

    # Images packed per grid step: grow the matmul N-dim / amortize per-step
    # overhead while keeping the im2col scratch modest.
    if images_per_step is None:
        images_per_step = max(1, min(N, 4096 // max(R, 1)))
    B = max(1, min(N, images_per_step))
    while N % B:
        B -= 1

    # Activations: plain reshape (no data movement) + bf16 cast (halves the
    # kernel's HBM->VMEM DMA).  No padded copies are written to HBM; the conv
    # zero-padding is created in a VMEM guard scratch inside the kernel.  In a
    # real model the bf16 cast fuses into the producing layer.
    c_f = c_nchw.reshape(N, C, R).astype(jnp.bfloat16)
    a_f = att_nchw.reshape(N, C, R).astype(jnp.bfloat16)

    # TODO(synk): BatchNorm is inference-mode only (running stats folded into the
    # conv weights/bias); train-mode batch statistics are not reproduced.
    eps = 1e-5
    scale = params["bn_gamma"] * jax.lax.rsqrt(params["bn_var"] + eps)      # (C,)
    bias = (params["bn_beta"] - params["bn_mean"] * scale).reshape(C, 1)
    bias = bias.astype(jnp.float32)
    w_folded = params["w_conv"] * scale[None, None, None, :]                # (kh,kw,Ci,Co)
    # Stacked-K conv weight (Cout, 9*Cin), tap-major along K to match the im2col slab.
    w_stack = jnp.transpose(w_folded.reshape(9, C, C), (2, 0, 1)).reshape(C, 9 * C)
    w_stack = w_stack.astype(jnp.bfloat16)

    # Conv1d(1, 1, k, padding=(k-1)//2, bias=False) over channels as a banded
    # (C, C) matmul; transposed so the kernel computes wei = M^T @ pooled.
    w1d = params["w1d"]
    k = w1d.shape[0]
    pad = (k - 1) // 2
    i_idx = jnp.arange(C)[:, None]
    o_idx = jnp.arange(C)[None, :]
    tap = i_idx - o_idx + pad
    m = jnp.where((tap >= 0) & (tap < k), w1d[jnp.clip(tap, 0, k - 1)], 0.0)
    m_t = m.T.astype(jnp.float32)                                           # (Co, Ci)

    # Column masks for the dx=-1 / dx=+1 conv taps (zero where a shifted read
    # would wrap across a row boundary).
    w_idx = jnp.arange(R) % W
    masks = jnp.stack([(w_idx != 0), (w_idx != W - 1)]).astype(jnp.bfloat16)  # (2, R)

    # TODO(synk): for very large C*H*W (e.g. 64x256x256) this fused single-pass
    # design exceeds VMEM (the im2col slab grows with 9*C*R); add a row-tiled
    # grid axis with a 2-row halo, K-tiled im2col, two-phase pooling (partial
    # sums + a second rescale pass) and raise vmem_limit_bytes per generation.
    kernel = functools.partial(_efm_kernel, H=H, W=W, C=C, B=B)
    out_flat = pl.pallas_call(
        kernel,
        out_shape=jax.ShapeDtypeStruct((N, C, R), jnp.float32),
        grid_spec=pltpu.PrefetchScalarGridSpec(
            num_scalar_prefetch=0,
            grid=(N // B,),
            in_specs=[
                pl.BlockSpec((B, C, R), lambda n: (n, 0, 0)),
                pl.BlockSpec((B, C, R), lambda n: (n, 0, 0)),
                pl.BlockSpec((C, 9 * C), lambda n: (0, 0)),
                pl.BlockSpec((C, 1), lambda n: (0, 0)),
                pl.BlockSpec((C, C), lambda n: (0, 0)),
                pl.BlockSpec((2, R), lambda n: (0, 0)),
            ],
            out_specs=pl.BlockSpec((B, C, R), lambda n: (n, 0, 0)),
            scratch_shapes=[
                pltpu.VMEM((C, R + 2 * (W + 1)), jnp.bfloat16),   # guarded x slab
                pltpu.VMEM((9 * C, B * R), jnp.bfloat16),         # im2col slab
            ],
        ),
        compiler_params=pltpu.CompilerParams(dimension_semantics=("parallel",)),
    )(c_f, a_f, w_stack, bias, m_t, masks)

    # Result is already NCHW-flat; just restore the spatial dims.
    return out_flat.reshape(N, C, H, W)


def efm_reference(c_nchw, att_nchw, params):
    """Pure-JAX reference of the same (inference-mode) semantics, NCHW, f32."""
    if att_nchw.shape[2:] != c_nchw.shape[2:]:
        att_nchw = jax.image.resize(
            att_nchw,
            (att_nchw.shape[0], att_nchw.shape[1]) + c_nchw.shape[2:],
            method="bilinear")
    x = c_nchw * att_nchw + c_nchw
    w_oihw = jnp.transpose(params["w_conv"], (3, 2, 0, 1))   # (Cout, Cin, 3, 3)
    y = jax.lax.conv_general_dilated(
        x, w_oihw, window_strides=(1, 1), padding=((1, 1), (1, 1)),
        dimension_numbers=("NCHW", "OIHW", "NCHW"),
        precision=jax.lax.Precision.HIGHEST)
    eps = 1e-5
    scale = params["bn_gamma"] / jnp.sqrt(params["bn_var"] + eps)
    bias = params["bn_beta"] - params["bn_mean"] * scale
    y = jnp.maximum(y * scale[None, :, None, None] + bias[None, :, None, None], 0.0)
    pooled = jnp.mean(y, axis=(2, 3))                        # (N, C)
    w1d = params["w1d"]
    k = w1d.shape[0]
    pad = (k - 1) // 2
    pp = jnp.pad(pooled, ((0, 0), (pad, pad)))
    Cc = pooled.shape[1]
    wei = sum(w1d[j] * pp[:, j:j + Cc] for j in range(k))
    wei = jax.nn.sigmoid(wei)
    return y * wei[:, :, None, None]


if __name__ == "__main__":
    N, C, H, W = 2, 16, 16, 16
    # kernel size of the channel Conv1d, as in the module __init__
    t = int(abs((log(C, 2) + 1) / 2))
    k = t if t % 2 else t + 1        # C=16 -> k=3

    key = jax.random.PRNGKey(0)
    kc, ka, kw, kg, kb, km, kv, k1 = jax.random.split(key, 8)
    c_in = jax.random.normal(kc, (N, C, H, W), jnp.float32)
    att_in = jax.nn.sigmoid(jax.random.normal(ka, (N, C, H, W), jnp.float32))

    params = {
        "w_conv": jax.random.normal(kw, (3, 3, C, C), jnp.float32) * 0.1,  # (kh,kw,Ci,Co)
        "bn_gamma": 0.5 + jax.random.uniform(kg, (C,), jnp.float32),
        "bn_beta": jax.random.normal(kb, (C,), jnp.float32) * 0.1,
        "bn_mean": jax.random.normal(km, (C,), jnp.float32) * 0.1,
        "bn_var": 0.5 + jax.random.uniform(kv, (C,), jnp.float32),
        "w1d": jax.random.normal(k1, (k,), jnp.float32) * 0.5,
    }

    out = jax.block_until_ready(efm_forward(c_in, att_in, params))
    ref = jax.block_until_ready(efm_reference(c_in, att_in, params))

    # Kernel uses bf16 activations + bf16 MXU operands with f32 accumulation;
    # reference is full f32, hence the widened tolerances.
    np.testing.assert_allclose(np.asarray(out), np.asarray(ref), rtol=3e-2, atol=5e-2)

    print("KERNEL_OK")
</pallas_src>

<mosaic_0001>
module attributes {stable_mosaic.version = 11 : i64} {
  func.func @_efm_kernel(%arg0: i32, %arg1: memref<2x16x256xbf16, #tpu.memory_space<vmem>>, %arg2: memref<2x16x256xbf16, #tpu.memory_space<vmem>>, %arg3: memref<16x144xbf16, #tpu.memory_space<vmem>>, %arg4: memref<16x1xf32, #tpu.memory_space<vmem>>, %arg5: memref<16x16xf32, #tpu.memory_space<vmem>>, %arg6: memref<2x256xbf16, #tpu.memory_space<vmem>>, %arg7: memref<2x16x256xf32, #tpu.memory_space<vmem>>, %arg8: memref<16x290xbf16, #tpu.memory_space<vmem>>, %arg9: memref<144x512xbf16, #tpu.memory_space<vmem>>) attributes {dimension_semantics = [#tpu.dimension_semantics<parallel>], iteration_bounds = array<i64: 1>, scalar_prefetch = 0 : i64, scratch_operands = 2 : i64, tpu.core_type = #tpu.core_type<tc>, window_params = [{transform_indices = @transform_0, window_bounds = array<i64: 2, 16, 256>}, {transform_indices = @transform_1, window_bounds = array<i64: 2, 16, 256>}, {pipeline_mode = #tpu.pipeline_mode<synchronous>, transform_indices = @transform_2, window_bounds = array<i64: 16, 144>}, {pipeline_mode = #tpu.pipeline_mode<synchronous>, transform_indices = @transform_3, window_bounds = array<i64: 16, 1>}, {pipeline_mode = #tpu.pipeline_mode<synchronous>, transform_indices = @transform_4, window_bounds = array<i64: 16, 16>}, {pipeline_mode = #tpu.pipeline_mode<synchronous>, transform_indices = @transform_5, window_bounds = array<i64: 2, 256>}, {transform_indices = @transform_6, window_bounds = array<i64: 2, 16, 256>}]} {
    %cst = arith.constant 0.000000e+00 : bf16
    %0 = vector.broadcast %cst : bf16 to vector<16x17xbf16>
    %c0 = arith.constant 0 : index
    %c0_0 = arith.constant 0 : index
    %1 = vector.load %arg8[%c0, %c0_0] : memref<16x290xbf16, #tpu.memory_space<vmem>>, vector<16x17xbf16>
    tpu.vector_store %arg8[%c0, %c0_0], %0 {strides = array<i32>} : memref<16x290xbf16, #tpu.memory_space<vmem>>, vector<16x17xbf16>,
    %cst_1 = arith.constant 0.000000e+00 : bf16
    %2 = vector.broadcast %cst_1 : bf16 to vector<16x17xbf16>
    %c0_2 = arith.constant 0 : index
    %c273 = arith.constant 273 : index
    %3 = vector.load %arg8[%c0_2, %c273] : memref<16x290xbf16, #tpu.memory_space<vmem>>, vector<16x17xbf16>
    tpu.vector_store %arg8[%c0_2, %c273], %2 {strides = array<i32>} : memref<16x290xbf16, #tpu.memory_space<vmem>>, vector<16x17xbf16>,
    %c0_3 = arith.constant 0 : index
    %c0_4 = arith.constant 0 : index
    %c0_5 = arith.constant 0 : index
    %4 = vector.load %arg1[%c0_3, %c0_4, %c0_5] : memref<2x16x256xbf16, #tpu.memory_space<vmem>>, vector<1x16x256xbf16>
    %5 = vector.shape_cast %4 : vector<1x16x256xbf16> to vector<16x256xbf16>
    %6 = arith.extf %5 : vector<16x256xbf16> to vector<16x256xf32>
    %c0_6 = arith.constant 0 : index
    %c0_7 = arith.constant 0 : index
    %c0_8 = arith.constant 0 : index
    %7 = vector.load %arg2[%c0_6, %c0_7, %c0_8] : memref<2x16x256xbf16, #tpu.memory_space<vmem>>, vector<1x16x256xbf16>
    %8 = vector.shape_cast %7 : vector<1x16x256xbf16> to vector<16x256xbf16>
    %9 = arith.extf %8 : vector<16x256xbf16> to vector<16x256xf32>
    %10 = arith.mulf %6, %9 : vector<16x256xf32>
    %11 = arith.addf %10, %6 : vector<16x256xf32>
    %12 = arith.truncf %11 : vector<16x256xf32> to vector<16x256xbf16>
    %c0_9 = arith.constant 0 : index
    %c17 = arith.constant 17 : index
    %13 = vector.load %arg8[%c0_9, %c17] : memref<16x290xbf16, #tpu.memory_space<vmem>>, vector<16x256xbf16>
    tpu.vector_store %arg8[%c0_9, %c17], %12 {strides = array<i32>} : memref<16x290xbf16, #tpu.memory_space<vmem>>, vector<16x256xbf16>,
    %c0_10 = arith.constant 0 : index
    %c0_11 = arith.constant 0 : index
    %14 = vector.load %arg8[%c0_10, %c0_11] : memref<16x290xbf16, #tpu.memory_space<vmem>>, vector<16x256xbf16>
    %c0_12 = arith.constant 0 : index
    %c0_13 = arith.constant 0 : index
    %15 = vector.load %arg6[%c0_12, %c0_13] : memref<2x256xbf16, #tpu.memory_space<vmem>>, vector<1x256xbf16>
    %16 = vector.broadcast %15 : vector<1x256xbf16> to vector<16x256xbf16>
    %17 = arith.mulf %14, %16 : vector<16x256xbf16>
    %c0_14 = arith.constant 0 : index
    %c0_15 = arith.constant 0 : index
    %18 = vector.load %arg9[%c0_14, %c0_15] : memref<144x512xbf16, #tpu.memory_space<vmem>>, vector<16x256xbf16>
    tpu.vector_store %arg9[%c0_14, %c0_15], %17 {strides = array<i32>} : memref<144x512xbf16, #tpu.memory_space<vmem>>, vector<16x256xbf16>,
    %c0_16 = arith.constant 0 : index
    %c1 = arith.constant 1 : index
    %19 = vector.load %arg8[%c0_16, %c1] : memref<16x290xbf16, #tpu.memory_space<vmem>>, vector<16x256xbf16>
    %c16 = arith.constant 16 : index
    %c0_17 = arith.constant 0 : index
    %20 = vector.load %arg9[%c16, %c0_17] : memref<144x512xbf16, #tpu.memory_space<vmem>>, vector<16x256xbf16>
    tpu.vector_store %arg9[%c16, %c0_17], %19 {strides = array<i32>} : memref<144x512xbf16, #tpu.memory_space<vmem>>, vector<16x256xbf16>,
    %c0_18 = arith.constant 0 : index
    %c2 = arith.constant 2 : index
    %21 = vector.load %arg8[%c0_18, %c2] : memref<16x290xbf16, #tpu.memory_space<vmem>>, vector<16x256xbf16>
    %c1_19 = arith.constant 1 : index
    %c0_20 = arith.constant 0 : index
    %22 = vector.load %arg6[%c1_19, %c0_20] : memref<2x256xbf16, #tpu.memory_space<vmem>>, vector<1x256xbf16>
    %23 = vector.broadcast %22 : vector<1x256xbf16> to vector<16x256xbf16>
    %24 = arith.mulf %21, %23 : vector<16x256xbf16>
    %c32 = arith.constant 32 : index
    %c0_21 = arith.constant 0 : index
    %25 = vector.load %arg9[%c32, %c0_21] : memref<144x512xbf16, #tpu.memory_space<vmem>>, vector<16x256xbf16>
    tpu.vector_store %arg9[%c32, %c0_21], %24 {strides = array<i32>} : memref<144x512xbf16, #tpu.memory_space<vmem>>, vector<16x256xbf16>,
    %c0_22 = arith.constant 0 : index
    %c16_23 = arith.constant 16 : index
    %26 = vector.load %arg8[%c0_22, %c16_23] : memref<16x290xbf16, #tpu.memory_space<vmem>>, vector<16x256xbf16>
    %c0_24 = arith.constant 0 : index
    %c0_25 = arith.constant 0 : index
    %27 = vector.load %arg6[%c0_24, %c0_25] : memref<2x256xbf16, #tpu.memory_space<vmem>>, vector<1x256xbf16>
    %28 = vector.broadcast %27 : vector<1x256xbf16> to vector<16x256xbf16>
    %29 = arith.mulf %26, %28 : vector<16x256xbf16>
    %c48 = arith.constant 48 : index
    %c0_26 = arith.constant 0 : index
    %30 = vector.load %arg9[%c48, %c0_26] : memref<144x512xbf16, #tpu.memory_space<vmem>>, vector<16x256xbf16>
    tpu.vector_store %arg9[%c48, %c0_26], %29 {strides = array<i32>} : memref<144x512xbf16, #tpu.memory_space<vmem>>, vector<16x256xbf16>,
    %c0_27 = arith.constant 0 : index
    %c17_28 = arith.constant 17 : index
    %31 = vector.load %arg8[%c0_27, %c17_28] : memref<16x290xbf16, #tpu.memory_space<vmem>>, vector<16x256xbf16>
    %c64 = arith.constant 64 : index
    %c0_29 = arith.constant 0 : index
    %32 = vector.load %arg9[%c64, %c0_29] : memref<144x512xbf16, #tpu.memory_space<vmem>>, vector<16x256xbf16>
    tpu.vector_store %arg9[%c64, %c0_29], %31 {strides = array<i32>} : memref<144x512xbf16, #tpu.memory_space<vmem>>, vector<16x256xbf16>,
    %c0_30 = arith.constant 0 : index
    %c18 = arith.constant 18 : index
    %33 = vector.load %arg8[%c0_30, %c18] : memref<16x290xbf16, #tpu.memory_space<vmem>>, vector<16x256xbf16>
    %c1_31 = arith.constant 1 : index
    %c0_32 = arith.constant 0 : index
    %34 = vector.load %arg6[%c1_31, %c0_32] : memref<2x256xbf16, #tpu.memory_space<vmem>>, vector<1x256xbf16>
    %35 = vector.broadcast %34 : vector<1x256xbf16> to vector<16x256xbf16>
    %36 = arith.mulf %33, %35 : vector<16x256xbf16>
    %c80 = arith.constant 80 : index
    %c0_33 = arith.constant 0 : index
    %37 = vector.load %arg9[%c80, %c0_33] : memref<144x512xbf16, #tpu.memory_space<vmem>>, vector<16x256xbf16>
    tpu.vector_store %arg9[%c80, %c0_33], %36 {strides = array<i32>} : memref<144x512xbf16, #tpu.memory_space<vmem>>, vector<16x256xbf16>,
    %c0_34 = arith.constant 0 : index
    %c32_35 = arith.constant 32 : index
    %38 = vector.load %arg8[%c0_34, %c32_35] : memref<16x290xbf16, #tpu.memory_space<vmem>>, vector<16x256xbf16>
    %c0_36 = arith.constant 0 : index
    %c0_37 = arith.constant 0 : index
    %39 = vector.load %arg6[%c0_36, %c0_37] : memref<2x256xbf16, #tpu.memory_space<vmem>>, vector<1x256xbf16>
    %40 = vector.broadcast %39 : vector<1x256xbf16> to vector<16x256xbf16>
    %41 = arith.mulf %38, %40 : vector<16x256xbf16>
    %c96 = arith.constant 96 : index
    %c0_38 = arith.constant 0 : index
    %42 = vector.load %arg9[%c96, %c0_38] : memref<144x512xbf16, #tpu.memory_space<vmem>>, vector<16x256xbf16>
    tpu.vector_store %arg9[%c96, %c0_38], %41 {strides = array<i32>} : memref<144x512xbf16, #tpu.memory_space<vmem>>, vector<16x256xbf16>,
    %c0_39 = arith.constant 0 : index
    %c33 = arith.constant 33 : index
    %43 = vector.load %arg8[%c0_39, %c33] : memref<16x290xbf16, #tpu.memory_space<vmem>>, vector<16x256xbf16>
    %c112 = arith.constant 112 : index
    %c0_40 = arith.constant 0 : index
    %44 = vector.load %arg9[%c112, %c0_40] : memref<144x512xbf16, #tpu.memory_space<vmem>>, vector<16x256xbf16>
    tpu.vector_store %arg9[%c112, %c0_40], %43 {strides = array<i32>} : memref<144x512xbf16, #tpu.memory_space<vmem>>, vector<16x256xbf16>,
    %c0_41 = arith.constant 0 : index
    %c34 = arith.constant 34 : index
    %45 = vector.load %arg8[%c0_41, %c34] : memref<16x290xbf16, #tpu.memory_space<vmem>>, vector<16x256xbf16>
    %c1_42 = arith.constant 1 : index
    %c0_43 = arith.constant 0 : index
    %46 = vector.load %arg6[%c1_42, %c0_43] : memref<2x256xbf16, #tpu.memory_space<vmem>>, vector<1x256xbf16>
    %47 = vector.broadcast %46 : vector<1x256xbf16> to vector<16x256xbf16>
    %48 = arith.mulf %45, %47 : vector<16x256xbf16>
    %c128 = arith.constant 128 : index
    %c0_44 = arith.constant 0 : index
    %49 = vector.load %arg9[%c128, %c0_44] : memref<144x512xbf16, #tpu.memory_space<vmem>>, vector<16x256xbf16>
    tpu.vector_store %arg9[%c128, %c0_44], %48 {strides = array<i32>} : memref<144x512xbf16, #tpu.memory_space<vmem>>, vector<16x256xbf16>,
    %c1_45 = arith.constant 1 : index
    %c0_46 = arith.constant 0 : index
    %c0_47 = arith.constant 0 : index
    %50 = vector.load %arg1[%c1_45, %c0_46, %c0_47] : memref<2x16x256xbf16, #tpu.memory_space<vmem>>, vector<1x16x256xbf16>
    %51 = vector.shape_cast %50 : vector<1x16x256xbf16> to vector<16x256xbf16>
    %52 = arith.extf %51 : vector<16x256xbf16> to vector<16x256xf32>
    %c1_48 = arith.constant 1 : index
    %c0_49 = arith.constant 0 : index
    %c0_50 = arith.constant 0 : index
    %53 = vector.load %arg2[%c1_48, %c0_49, %c0_50] : memref<2x16x256xbf16, #tpu.memory_space<vmem>>, vector<1x16x256xbf16>
    %54 = vector.shape_cast %53 : vector<1x16x256xbf16> to vector<16x256xbf16>
    %55 = arith.extf %54 : vector<16x256xbf16> to vector<16x256xf32>
    %56 = arith.mulf %52, %55 : vector<16x256xf32>
    %57 = arith.addf %56, %52 : vector<16x256xf32>
    %58 = arith.truncf %57 : vector<16x256xf32> to vector<16x256xbf16>
    %c0_51 = arith.constant 0 : index
    %c17_52 = arith.constant 17 : index
    %59 = vector.load %arg8[%c0_51, %c17_52] : memref<16x290xbf16, #tpu.memory_space<vmem>>, vector<16x256xbf16>
    tpu.vector_store %arg8[%c0_51, %c17_52], %58 {strides = array<i32>} : memref<16x290xbf16, #tpu.memory_space<vmem>>, vector<16x256xbf16>,
    %c0_53 = arith.constant 0 : index
    %c0_54 = arith.constant 0 : index
    %60 = vector.load %arg8[%c0_53, %c0_54] : memref<16x290xbf16, #tpu.memory_space<vmem>>, vector<16x256xbf16>
    %c0_55 = arith.constant 0 : index
    %c0_56 = arith.constant 0 : index
    %61 = vector.load %arg6[%c0_55, %c0_56] : memref<2x256xbf16, #tpu.memory_space<vmem>>, vector<1x256xbf16>
    %62 = vector.broadcast %61 : vector<1x256xbf16> to vector<16x256xbf16>
    %63 = arith.mulf %60, %62 : vector<16x256xbf16>
    %c0_57 = arith.constant 0 : index
    %c256 = arith.constant 256 : index
    %64 = vector.load %arg9[%c0_57, %c256] : memref<144x512xbf16, #tpu.memory_space<vmem>>, vector<16x256xbf16>
    tpu.vector_store %arg9[%c0_57, %c256], %63 {strides = array<i32>} : memref<144x512xbf16, #tpu.memory_space<vmem>>, vector<16x256xbf16>,
    %c0_58 = arith.constant 0 : index
    %c1_59 = arith.constant 1 : index
    %65 = vector.load %arg8[%c0_58, %c1_59] : memref<16x290xbf16, #tpu.memory_space<vmem>>, vector<16x256xbf16>
    %c16_60 = arith.constant 16 : index
    %c256_61 = arith.constant 256 : index
    %66 = vector.load %arg9[%c16_60, %c256_61] : memref<144x512xbf16, #tpu.memory_space<vmem>>, vector<16x256xbf16>
    tpu.vector_store %arg9[%c16_60, %c256_61], %65 {strides = array<i32>} : memref<144x512xbf16, #tpu.memory_space<vmem>>, vector<16x256xbf16>,
    %c0_62 = arith.constant 0 : index
    %c2_63 = arith.constant 2 : index
    %67 = vector.load %arg8[%c0_62, %c2_63] : memref<16x290xbf16, #tpu.memory_space<vmem>>, vector<16x256xbf16>
    %c1_64 = arith.constant 1 : index
    %c0_65 = arith.constant 0 : index
    %68 = vector.load %arg6[%c1_64, %c0_65] : memref<2x256xbf16, #tpu.memory_space<vmem>>, vector<1x256xbf16>
    %69 = vector.broadcast %68 : vector<1x256xbf16> to vector<16x256xbf16>
    %70 = arith.mulf %67, %69 : vector<16x256xbf16>
    %c32_66 = arith.constant 32 : index
    %c256_67 = arith.constant 256 : index
    %71 = vector.load %arg9[%c32_66, %c256_67] : memref<144x512xbf16, #tpu.memory_space<vmem>>, vector<16x256xbf16>
    tpu.vector_store %arg9[%c32_66, %c256_67], %70 {strides = array<i32>} : memref<144x512xbf16, #tpu.memory_space<vmem>>, vector<16x256xbf16>,
    %c0_68 = arith.constant 0 : index
    %c16_69 = arith.constant 16 : index
    %72 = vector.load %arg8[%c0_68, %c16_69] : memref<16x290xbf16, #tpu.memory_space<vmem>>, vector<16x256xbf16>
    %c0_70 = arith.constant 0 : index
    %c0_71 = arith.constant 0 : index
    %73 = vector.load %arg6[%c0_70, %c0_71] : memref<2x256xbf16, #tpu.memory_space<vmem>>, vector<1x256xbf16>
    %74 = vector.broadcast %73 : vector<1x256xbf16> to vector<16x256xbf16>
    %75 = arith.mulf %72, %74 : vector<16x256xbf16>
    %c48_72 = arith.constant 48 : index
    %c256_73 = arith.constant 256 : index
    %76 = vector.load %arg9[%c48_72, %c256_73] : memref<144x512xbf16, #tpu.memory_space<vmem>>, vector<16x256xbf16>
    tpu.vector_store %arg9[%c48_72, %c256_73], %75 {strides = array<i32>} : memref<144x512xbf16, #tpu.memory_space<vmem>>, vector<16x256xbf16>,
    %c0_74 = arith.constant 0 : index
    %c17_75 = arith.constant 17 : index
    %77 = vector.load %arg8[%c0_74, %c17_75] : memref<16x290xbf16, #tpu.memory_space<vmem>>, vector<16x256xbf16>
    %c64_76 = arith.constant 64 : index
    %c256_77 = arith.constant 256 : index
    %78 = vector.load %arg9[%c64_76, %c256_77] : memref<144x512xbf16, #tpu.memory_space<vmem>>, vector<16x256xbf16>
    tpu.vector_store %arg9[%c64_76, %c256_77], %77 {strides = array<i32>} : memref<144x512xbf16, #tpu.memory_space<vmem>>, vector<16x256xbf16>,
    %c0_78 = arith.constant 0 : index
    %c18_79 = arith.constant 18 : index
    %79 = vector.load %arg8[%c0_78, %c18_79] : memref<16x290xbf16, #tpu.memory_space<vmem>>, vector<16x256xbf16>
    %c1_80 = arith.constant 1 : index
    %c0_81 = arith.constant 0 : index
    %80 = vector.load %arg6[%c1_80, %c0_81] : memref<2x256xbf16, #tpu.memory_space<vmem>>, vector<1x256xbf16>
    %81 = vector.broadcast %80 : vector<1x256xbf16> to vector<16x256xbf16>
    %82 = arith.mulf %79, %81 : vector<16x256xbf16>
    %c80_82 = arith.constant 80 : index
    %c256_83 = arith.constant 256 : index
    %83 = vector.load %arg9[%c80_82, %c256_83] : memref<144x512xbf16, #tpu.memory_space<vmem>>, vector<16x256xbf16>
    tpu.vector_store %arg9[%c80_82, %c256_83], %82 {strides = array<i32>} : memref<144x512xbf16, #tpu.memory_space<vmem>>, vector<16x256xbf16>,
    %c0_84 = arith.constant 0 : index
    %c32_85 = arith.constant 32 : index
    %84 = vector.load %arg8[%c0_84, %c32_85] : memref<16x290xbf16, #tpu.memory_space<vmem>>, vector<16x256xbf16>
    %c0_86 = arith.constant 0 : index
    %c0_87 = arith.constant 0 : index
    %85 = vector.load %arg6[%c0_86, %c0_87] : memref<2x256xbf16, #tpu.memory_space<vmem>>, vector<1x256xbf16>
    %86 = vector.broadcast %85 : vector<1x256xbf16> to vector<16x256xbf16>
    %87 = arith.mulf %84, %86 : vector<16x256xbf16>
    %c96_88 = arith.constant 96 : index
    %c256_89 = arith.constant 256 : index
    %88 = vector.load %arg9[%c96_88, %c256_89] : memref<144x512xbf16, #tpu.memory_space<vmem>>, vector<16x256xbf16>
    tpu.vector_store %arg9[%c96_88, %c256_89], %87 {strides = array<i32>} : memref<144x512xbf16, #tpu.memory_space<vmem>>, vector<16x256xbf16>,
    %c0_90 = arith.constant 0 : index
    %c33_91 = arith.constant 33 : index
    %89 = vector.load %arg8[%c0_90, %c33_91] : memref<16x290xbf16, #tpu.memory_space<vmem>>, vector<16x256xbf16>
    %c112_92 = arith.constant 112 : index
    %c256_93 = arith.constant 256 : index
    %90 = vector.load %arg9[%c112_92, %c256_93] : memref<144x512xbf16, #tpu.memory_space<vmem>>, vector<16x256xbf16>
    tpu.vector_store %arg9[%c112_92, %c256_93], %89 {strides = array<i32>} : memref<144x512xbf16, #tpu.memory_space<vmem>>, vector<16x256xbf16>,
    %c0_94 = arith.constant 0 : index
    %c34_95 = arith.constant 34 : index
    %91 = vector.load %arg8[%c0_94, %c34_95] : memref<16x290xbf16, #tpu.memory_space<vmem>>, vector<16x256xbf16>
    %c1_96 = arith.constant 1 : index
    %c0_97 = arith.constant 0 : index
    %92 = vector.load %arg6[%c1_96, %c0_97] : memref<2x256xbf16, #tpu.memory_space<vmem>>, vector<1x256xbf16>
    %93 = vector.broadcast %92 : vector<1x256xbf16> to vector<16x256xbf16>
    %94 = arith.mulf %91, %93 : vector<16x256xbf16>
    %c128_98 = arith.constant 128 : index
    %c256_99 = arith.constant 256 : index
    %95 = vector.load %arg9[%c128_98, %c256_99] : memref<144x512xbf16, #tpu.memory_space<vmem>>, vector<16x256xbf16>
    tpu.vector_store %arg9[%c128_98, %c256_99], %94 {strides = array<i32>} : memref<144x512xbf16, #tpu.memory_space<vmem>>, vector<16x256xbf16>,
    %c0_100 = arith.constant 0 : index
    %c0_101 = arith.constant 0 : index
    %96 = vector.load %arg3[%c0_100, %c0_101] : memref<16x144xbf16, #tpu.memory_space<vmem>>, vector<16x144xbf16>
    %c0_102 = arith.constant 0 : index
    %c0_103 = arith.constant 0 : index
    %97 = vector.load %arg9[%c0_102, %c0_103] : memref<144x512xbf16, #tpu.memory_space<vmem>>, vector<144x512xbf16>
    %cst_104 = arith.constant dense<0.000000e+00> : vector<16x512xf32>
    %98 = tpu.matmul %96, %97, %cst_104 {dimension_numbers = #tpu.dot_dimension_numbers<[1], [0], [0], [1], [0, 0, 1, 1], [], []>} : vector<16x144xbf16>, vector<144x512xbf16>, vector<16x512xf32> -> vector<16x512xf32>
    %c0_105 = arith.constant 0 : index
    %c0_106 = arith.constant 0 : index
    %99 = vector.load %arg4[%c0_105, %c0_106] : memref<16x1xf32, #tpu.memory_space<vmem>>, vector<16x1xf32>
    %100 = vector.broadcast %99 : vector<16x1xf32> to vector<16x512xf32>
    %101 = arith.addf %98, %100 : vector<16x512xf32>
    %cst_107 = arith.constant 0.000000e+00 : f32
    %102 = vector.broadcast %cst_107 : f32 to vector<16x512xf32>
    %103 = arith.maximumf %101, %102 : vector<16x512xf32>
    %104 = vector.extract_strided_slice %103 {offsets = [0, 0], sizes = [16, 256], strides = [1, 1]} : vector<16x512xf32> to vector<16x256xf32>
    %cst_108 = arith.constant dense<0.000000e+00> : vector<16xf32>
    %105 = vector.multi_reduction <add>, %104, %cst_108 [1] : vector<16x256xf32> to vector<16xf32>
    %106 = vector.shape_cast %105 : vector<16xf32> to vector<16x1xf32>
    %cst_109 = arith.constant 3.906250e-03 : f32
    %107 = vector.broadcast %cst_109 : f32 to vector<16x1xf32>
    %108 = arith.mulf %106, %107 : vector<16x1xf32>
    %c0_110 = arith.constant 0 : index
    %c0_111 = arith.constant 0 : index
    %109 = vector.load %arg5[%c0_110, %c0_111] : memref<16x16xf32, #tpu.memory_space<vmem>>, vector<16x16xf32>
    %cst_112 = arith.constant dense<0.000000e+00> : vector<16x1xf32>
    %110 = tpu.matmul %109, %108, %cst_112 {dimension_numbers = #tpu.dot_dimension_numbers<[1], [0], [0], [1], [0, 0, 1, 1], [], []>} : vector<16x16xf32>, vector<16x1xf32>, vector<16x1xf32> -> vector<16x1xf32>
    %111 = arith.negf %110 : vector<16x1xf32>
    %112 = math.exp %111 : vector<16x1xf32>
    %cst_113 = arith.constant 1.000000e+00 : f32
    %113 = vector.broadcast %cst_113 : f32 to vector<16x1xf32>
    %114 = arith.addf %113, %112 : vector<16x1xf32>
    %115 = arith.divf %113, %114 : vector<16x1xf32>
    %116 = vector.broadcast %115 : vector<16x1xf32> to vector<16x256xf32>
    %117 = arith.mulf %104, %116 : vector<16x256xf32>
    %c0_114 = arith.constant 0 : index
    %c0_115 = arith.constant 0 : index
    %c0_116 = arith.constant 0 : index
    %118 = vector.load %arg7[%c0_114, %c0_115, %c0_116] : memref<2x16x256xf32, #tpu.memory_space<vmem>>, vector<1x16x256xf32>
    %119 = vector.shape_cast %118 : vector<1x16x256xf32> to vector<16x256xf32>
    %120 = vector.shape_cast %117 : vector<16x256xf32> to vector<1x16x256xf32>
    tpu.vector_store %arg7[%c0_114, %c0_115, %c0_116], %120 {strides = array<i32>} : memref<2x16x256xf32, #tpu.memory_space<vmem>>, vector<1x16x256xf32>,
    %121 = vector.extract_strided_slice %103 {offsets = [0, 256], sizes = [16, 256], strides = [1, 1]} : vector<16x512xf32> to vector<16x256xf32>
    %cst_117 = arith.constant dense<0.000000e+00> : vector<16xf32>
    %122 = vector.multi_reduction <add>, %121, %cst_117 [1] : vector<16x256xf32> to vector<16xf32>
    %123 = vector.shape_cast %122 : vector<16xf32> to vector<16x1xf32>
    %cst_118 = arith.constant 3.906250e-03 : f32
    %124 = vector.broadcast %cst_118 : f32 to vector<16x1xf32>
    %125 = arith.mulf %123, %124 : vector<16x1xf32>
    %c0_119 = arith.constant 0 : index
    %c0_120 = arith.constant 0 : index
    %126 = vector.load %arg5[%c0_119, %c0_120] : memref<16x16xf32, #tpu.memory_space<vmem>>, vector<16x16xf32>
    %cst_121 = arith.constant dense<0.000000e+00> : vector<16x1xf32>
    %127 = tpu.matmul %126, %125, %cst_121 {dimension_numbers = #tpu.dot_dimension_numbers<[1], [0], [0], [1], [0, 0, 1, 1], [], []>} : vector<16x16xf32>, vector<16x1xf32>, vector<16x1xf32> -> vector<16x1xf32>
    %128 = arith.negf %127 : vector<16x1xf32>
    %129 = math.exp %128 : vector<16x1xf32>
    %cst_122 = arith.constant 1.000000e+00 : f32
    %130 = vector.broadcast %cst_122 : f32 to vector<16x1xf32>
    %131 = arith.addf %130, %129 : vector<16x1xf32>
    %132 = arith.divf %130, %131 : vector<16x1xf32>
    %133 = vector.broadcast %132 : vector<16x1xf32> to vector<16x256xf32>
    %134 = arith.mulf %121, %133 : vector<16x256xf32>
    %c1_123 = arith.constant 1 : index
    %c0_124 = arith.constant 0 : index
    %c0_125 = arith.constant 0 : index
    %135 = vector.load %arg7[%c1_123, %c0_124, %c0_125] : memref<2x16x256xf32, #tpu.memory_space<vmem>>, vector<1x16x256xf32>
    %136 = vector.shape_cast %135 : vector<1x16x256xf32> to vector<16x256xf32>
    %137 = vector.shape_cast %134 : vector<16x256xf32> to vector<1x16x256xf32>
    tpu.vector_store %arg7[%c1_123, %c0_124, %c0_125], %137 {strides = array<i32>} : memref<2x16x256xf32, #tpu.memory_space<vmem>>, vector<1x16x256xf32>,
    return
  }
  func.func @transform_0(%arg0: i32) -> (i32, i32, i32) {
    %c0_i32 = arith.constant 0 : i32
    %c0_i32_0 = arith.constant 0 : i32
    %c0_i32_1 = arith.constant 0 : i32
    return %arg0, %c0_i32, %c0_i32_0 : i32, i32, i32
  }
  func.func @transform_1(%arg0: i32) -> (i32, i32, i32) {
    %c0_i32 = arith.constant 0 : i32
    %c0_i32_0 = arith.constant 0 : i32
    %c0_i32_1 = arith.constant 0 : i32
    return %arg0, %c0_i32, %c0_i32_0 : i32, i32, i32
  }
  func.func @transform_2(%arg0: i32) -> (i32, i32) {
    %c0_i32 = arith.constant 0 : i32
    %c0_i32_0 = arith.constant 0 : i32
    %c0_i32_1 = arith.constant 0 : i32
    return %c0_i32, %c0_i32_0 : i32, i32
  }
  func.func @transform_3(%arg0: i32) -> (i32, i32) {
    %c0_i32 = arith.constant 0 : i32
    %c0_i32_0 = arith.constant 0 : i32
    %c0_i32_1 = arith.constant 0 : i32
    return %c0_i32, %c0_i32_0 : i32, i32
  }
  func.func @transform_4(%arg0: i32) -> (i32, i32) {
    %c0_i32 = arith.constant 0 : i32
    %c0_i32_0 = arith.constant 0 : i32
    %c0_i32_1 = arith.constant 0 : i32
    return %c0_i32, %c0_i32_0 : i32, i32
  }
  func.func @transform_5(%arg0: i32) -> (i32, i32) {
    %c0_i32 = arith.constant 0 : i32
    %c0_i32_0 = arith.constant 0 : i32
    %c0_i32_1 = arith.constant 0 : i32
    return %c0_i32, %c0_i32_0 : i32, i32
  }
  func.func @transform_6(%arg0: i32) -> (i32, i32, i32) {
    %c0_i32 = arith.constant 0 : i32
    %c0_i32_0 = arith.constant 0 : i32
    %c0_i32_1 = arith.constant 0 : i32
    return %arg0, %c0_i32, %c0_i32_0 : i32, i32, i32
  }
}

</mosaic_0001>

<llo_original>
// kernel: tpu_custom_call.1
$region0: #{tpu_custom_call.1}
  #allocation0 [shape = 'u32[]', space=smem, size = 0x4, offset = 0x4, fixed_abs, tag = 'smem constant byte address 0x4 - core index']
  #allocation1 [shape = 'u32[72,128]{1,0:T(1,128)}', space=vmem, size = 0x9000, scoped, tag = 'internal scratch']
  #allocation2 [shape = 'bf16[16,290]{1,0:T(8,128)(2,1)}', space=vmem, size = 0x3000, scoped, tag = 'scratch operand']
  #allocation3 [shape = 'bf16[144,512]{1,0:T(8,128)(2,1)}', space=vmem, size = 0x24000, scoped, tag = 'scratch operand']
  %s0 = inlined_call_operand.hbm [shape: bf16[2,16,256], index: 0, kind: input, shape index: {}]
  %s1 = inlined_call_operand.hbm [shape: bf16[2,16,256], index: 1, kind: input, shape index: {}]
  %s2 = inlined_call_operand.vmem [shape: bf16[16,144], index: 2, kind: input, shape index: {}]
  %s3 = inlined_call_operand.vmem [shape: f32[16,1], index: 3, kind: input, shape index: {}]
  %s4 = inlined_call_operand.hbm [shape: f32[16,16], index: 4, kind: input, shape index: {}]
  %s5 = inlined_call_operand.vmem [shape: bf16[2,256], index: 5, kind: input, shape index: {}]
  %s6 = inlined_call_operand.hbm [shape: f32[2,16,256], index: 6, kind: output, shape index: {}]
  %s7 = sld [smem:[#allocation0]]
  $region46: #{tpu_custom_call.1} parent=0
    _
  %s9 = ssub.s32 1, %s7
  %s10 = scalar_select 0, %s9, %s7
  $region1: #{tpu_custom_call.1} parent=0
    #allocation4 [shape = 'u8[16384]{0}', space=vmem, size = 0x4000, scoped, tag = 'input window, operand 0, single buffered']
    #allocation5 [shape = 's32[1]{0}', space=sflag, size = 0x4, scoped, tag = 'scoped memory for tpu_custom_call.1']
    #allocation6 [shape = 's32[1]{0}', space=sflag, size = 0x4, scoped, tag = 'scoped memory for tpu_custom_call.1']
    #allocation7 [shape = 'u8[16384]{0}', space=vmem, size = 0x4000, scoped, tag = 'input window, operand 1, single buffered']
    #allocation8 [shape = 's32[1]{0}', space=sflag, size = 0x4, scoped, tag = 'scoped memory for tpu_custom_call.1']
    #allocation9 [shape = 'u8[8192]{0}', space=vmem, size = 0x2000, scoped, tag = 'input window, operand 4, single buffered']
    #allocation10 [shape = 'u8[32768]{0}', space=vmem, size = 0x8000, scoped, tag = 'output window, operand 0, single buffered']
    %11 = vsyncpa [#allocation5], 0
    %12 = vsyncpa [#allocation8], 0
    %13 = vsyncpa [#allocation6], 0
    // Predicated region
    $region2: #{tpu_custom_call.1} parent=1 // pred_check
      _
    $region3: #{tpu_custom_call.1} parent=1 // pred_check_branch
      %15 = sbr.rel (0) target = $region5
    $region4: #{tpu_custom_call.1} parent=1 // pred_region
      %17 = vsyncadd [#allocation5], 0
      %s18 = sshll.u32 %s0, 4
      %s19 = int_to_ptr.hbm [resolvable:$true] %s18
      %s20 = sshll.u32 [#allocation4], 4
      %s21 = int_to_ptr.vmem [resolvable:$true] %s20
      %26 = dma.hbm_to_vmem [thread:$0]  %s19, 512, %s21, [#allocation5], 128, 128, 8
    $region5: #{tpu_custom_call.1} parent=1 // pred_fallthru
      _
    // Predicated region
    $region6: #{tpu_custom_call.1} parent=1 // pred_check
      _
    $region7: #{tpu_custom_call.1} parent=1 // pred_check_branch
      %28 = sbr.rel (0) target = $region9
    $region8: #{tpu_custom_call.1} parent=1 // pred_region
      %30 = vsyncadd [#allocation8], 0
      %s31 = sshll.u32 %s1, 4
      %s32 = int_to_ptr.hbm [resolvable:$true] %s31
      %s33 = sshll.u32 [#allocation7], 4
      %s34 = int_to_ptr.vmem [resolvable:$true] %s33
      %39 = dma.hbm_to_vmem [thread:$0]  %s32, 512, %s34, [#allocation8], 128, 128, 8
    $region9: #{tpu_custom_call.1} parent=1 // pred_fallthru
      _
    // Predicated region
    $region10: #{tpu_custom_call.1} parent=1 // pred_check
      _
    $region11: #{tpu_custom_call.1} parent=1 // pred_check_branch
      %41 = sbr.rel (0) target = $region13
    $region12: #{tpu_custom_call.1} parent=1 // pred_region
      _
    $region13: #{tpu_custom_call.1} parent=1 // pred_fallthru
      _
    // Predicated region
    $region14: #{tpu_custom_call.1} parent=1 // pred_check
      _
    $region15: #{tpu_custom_call.1} parent=1 // pred_check_branch
      %43 = sbr.rel (0) target = $region17
    $region16: #{tpu_custom_call.1} parent=1 // pred_region
      _
    $region17: #{tpu_custom_call.1} parent=1 // pred_fallthru
      _
    // Predicated region
    $region18: #{tpu_custom_call.1} parent=1 // pred_check
      _
    $region19: #{tpu_custom_call.1} parent=1 // pred_check_branch
      %45 = sbr.rel (0) target = $region21
    $region20: #{tpu_custom_call.1} parent=1 // pred_region
      %47 = vsyncadd [#allocation8], 0
      %s48 = sshll.u32 %s4, 4
      %s49 = int_to_ptr.hbm [resolvable:$true] %s48
      %s50 = sshll.u32 [#allocation9], 4
      %s51 = int_to_ptr.vmem [resolvable:$true] %s50
      %56 = dma.hbm_to_vmem [thread:$0]  %s49, 256, %s51, [#allocation8], 128, 128, 8
    $region21: #{tpu_custom_call.1} parent=1 // pred_fallthru
      _
    // Predicated region
    $region22: #{tpu_custom_call.1} parent=1 // pred_check
      _
    $region23: #{tpu_custom_call.1} parent=1 // pred_check_branch
      %58 = sbr.rel (0) target = $region25
    $region24: #{tpu_custom_call.1} parent=1 // pred_region
      _
    $region25: #{tpu_custom_call.1} parent=1 // pred_fallthru
      _
    // Predicated region
    $region26: #{tpu_custom_call.1} parent=1 // pred_check
      _
    $region27: #{tpu_custom_call.1} parent=1 // pred_check_branch
      %60 = sbr.rel (0) target = $region29
    $region28: #{tpu_custom_call.1} parent=1 // pred_region
      %62 = dma.done [#allocation5], 512
    $region29: #{tpu_custom_call.1} parent=1 // pred_fallthru
      _
    // Predicated region
    $region30: #{tpu_custom_call.1} parent=1 // pred_check
      _
    $region31: #{tpu_custom_call.1} parent=1 // pred_check_branch
      %64 = sbr.rel (0) target = $region33
    $region32: #{tpu_custom_call.1} parent=1 // pred_region
      %66 = dma.done [#allocation8], 512
    $region33: #{tpu_custom_call.1} parent=1 // pred_fallthru
      _
    // Predicated region
    $region34: #{tpu_custom_call.1} parent=1 // pred_check
      _
    $region35: #{tpu_custom_call.1} parent=1 // pred_check_branch
      %68 = sbr.rel (0) target = $region37
    $region36: #{tpu_custom_call.1} parent=1 // pred_region
      %70 = dma.done [#allocation8], 256
    $region37: #{tpu_custom_call.1} parent=1 // pred_fallthru
      _
    %vm72 = vcmask 134144
    %73 = vst.msk [vmem:[#allocation2] sm:$0xf] %vm72, 0
    %74 = vst.msk [vmem:[#allocation2 + $0xc] sm:$0xf] %vm72, 0
    %vm75 = vcmask 273544
    %76 = vst.msk [vmem:[#allocation2 + $0x8] sm:$0xf] %vm75, 0
    %77 = vst.msk [vmem:[#allocation2 + $0x14] sm:$0xf] %vm75, 0
    %v78 = vld [vmem:[#allocation4] sm:$0xff]
    %v79 = vld [vmem:[#allocation4 + $0x8] sm:$0xff]
    %v80 = vunpack.c.l.bf16 %v78
    %v81 = vunpack.c.h.bf16 %v78
    %v82 = vunpack.c.l.bf16 %v79
    %v83 = vunpack.c.h.bf16 %v79
    %v84 = vld [vmem:[#allocation7] sm:$0xff]
    %v85 = vld [vmem:[#allocation7 + $0x8] sm:$0xff]
    %v86 = vunpack.c.l.bf16 %v84
    %v87 = vunpack.c.h.bf16 %v84
    %v88 = vunpack.c.l.bf16 %v85
    %v89 = vunpack.c.h.bf16 %v85
    %v90 = vmul.f32 %v80, %v86
    %v91 = vmul.f32 %v81, %v87
    %v92 = vmul.f32 %v82, %v88
    %v93 = vmul.f32 %v83, %v89
    %v94 = vadd.f32 %v90, %v80
    %v95 = vadd.f32 %v91, %v81
    %v96 = vadd.f32 %v92, %v82
    %v97 = vadd.f32 %v93, %v83
    %v98 = vpack.c.bf16 %v95, %v94
    %v99 = vpack.c.bf16 %v97, %v96
    %102 = vrot.lane.b32.xlu0 %v98, 17
    %v103 = vpop.permute.xlu0 %102
    %104 = vrot.lane.b32.xlu0 %v99, 17
    %v105 = vpop.permute.xlu0 %104
    %v106 = vrot.slane %v103, 4
    %v107 = vrot.slane %v105, 4
    %vm108 = vcmask 138240
    %v109 = vsel %vm108, %v106, %v103
    %v110 = vsel %vm108, %v107, %v105
    %vm115 = vcmask 1043592
    %vm116 = vcmask 1047556
    %vm117 = vmor %vm116, %vm115
    %118 = vst.msk [vmem:[#allocation2] sm:$0xff] %vm117, %v109
    %119 = vst.msk [vmem:[#allocation2 + $0x8] sm:$0xf] %vm72, %v106
    %120 = vst.msk [vmem:[#allocation2 + $0xc] sm:$0xff] %vm117, %v110
    %121 = vst.msk [vmem:[#allocation2 + $0x14] sm:$0xf] %vm72, %v107
    %v122 = vld [vmem:[#allocation2] sm:$0xff]
    %v123 = vld [vmem:[#allocation2 + $0xc] sm:$0xff]
    %v124 = vld [vmem:[%s5] sm:$0x3]
    %126 = vst [vmem:[#allocation1] ss:$9 sm:$0xff] %v124
    %v127 = vld [vmem:[#allocation1] sm:$0xff]
    %v128 = vld [vmem:[#allocation1 + $0x9] sm:$0xff]
    %v129 = vpack.i.b16 %v127, %v127
    %v131 = vperm.slane %v129, 0
    %v132 = vpack.i.b16 %v128, %v128
    %v134 = vperm.slane %v132, 0
    %v135 = vunpack.c.l.bf16 %v122
    %v136 = vunpack.c.h.bf16 %v122
    %v137 = vunpack.c.l.bf16 %v123
    %v138 = vunpack.c.h.bf16 %v123
    %v139 = vunpack.c.l.bf16 %v131
    %v140 = vunpack.c.l.bf16 %v134
    %v141 = vmul.f32 %v135, %v139
    %v142 = vmul.f32 %v136, %v140
    %v143 = vmul.f32 %v137, %v139
    %v144 = vmul.f32 %v138, %v140
    %v145 = vpack.c.bf16 %v142, %v141
    %v146 = vpack.c.bf16 %v144, %v143
    %147 = vst [vmem:[#allocation3] sm:$0xff] %v145
    %148 = vst [vmem:[#allocation3 + $0x10] sm:$0xff] %v146
    %v149 = vld [vmem:[#allocation2] sm:$0xff]
    %v150 = vld [vmem:[#allocation2 + $0x8] sm:$0xf]
    %v151 = vld [vmem:[#allocation2 + $0xc] sm:$0xff]
    %v152 = vld [vmem:[#allocation2 + $0x14] sm:$0xf]
    %157 = vrot.lane.b32.xlu0 %v149, 127
    %v158 = vpop.permute.xlu0 %157
    %159 = vrot.lane.b32.xlu0 %v150, 127
    %v160 = vpop.permute.xlu0 %159
    %161 = vrot.lane.b32.xlu0 %v151, 127
    %v162 = vpop.permute.xlu0 %161
    %163 = vrot.lane.b32.xlu0 %v152, 127
    %v164 = vpop.permute.xlu0 %163
    %v165 = vrot.slane %v158, 4
    %v166 = vrot.slane %v160, 4
    %v167 = vrot.slane %v162, 4
    %v168 = vrot.slane %v164, 4
    %vm169 = vcmask 1043456
    %v170 = vsel %vm169, %v165, %v166
    %vm171 = vcmask 1039360
    %v172 = vsel %vm171, %v158, %v170
    %v173 = vsel %vm169, %v167, %v168
    %v174 = vsel %vm171, %v162, %v173
    %177 = vst [vmem:[#allocation3 + $0x20] sm:$0xff] %v172
    %178 = vst [vmem:[#allocation3 + $0x30] sm:$0xff] %v174
    %v179 = vld [vmem:[#allocation2] sm:$0xff]
    %v180 = vld [vmem:[#allocation2 + $0x8] sm:$0xf]
    %v181 = vld [vmem:[#allocation2 + $0xc] sm:$0xff]
    %v182 = vld [vmem:[#allocation2 + $0x14] sm:$0xf]
    %v183 = vld [vmem:[%s5] sm:$0x3]
    %185 = vst [vmem:[#allocation1] ss:$9 sm:$0xff] %v183
    %v186 = vld [vmem:[#allocation1] sm:$0xff]
    %v187 = vld [vmem:[#allocation1 + $0x9] sm:$0xff]
    %v188 = vshrl.u32 %v186, 16
    %v189 = vpack.i.b16 %v188, %v188
    %v191 = vperm.slane %v189, 0
    %v192 = vshrl.u32 %v187, 16
    %v193 = vpack.i.b16 %v192, %v192
    %v195 = vperm.slane %v193, 0
    %v196 = vunpack.c.l.bf16 %v179
    %v197 = vunpack.c.h.bf16 %v179
    %v198 = vunpack.c.l.bf16 %v180
    %v199 = vunpack.c.l.bf16 %v181
    %v200 = vunpack.c.h.bf16 %v181
    %v201 = vunpack.c.l.bf16 %v182
    %v202 = vunpack.c.l.bf16 %v191
    %v203 = vunpack.c.l.bf16 %v195
    %206 = vrot.lane.b32.xlu0 %v202, 2
    %v207 = vpop.permute.xlu0 %206
    %208 = vrot.lane.b32.xlu0 %v203, 2
    %v209 = vpop.permute.xlu0 %208
    %vm210 = vcmask 15360
    %v211 = vsel %vm210, %v207, %v209
    %v215 = vmul.f32 %v196, %v207
    %v216 = vmul.f32 %v197, %v211
    %v217 = vmul.f32 %v198, %v209
    %v218 = vmul.f32 %v199, %v207
    %v219 = vmul.f32 %v200, %v211
    %v220 = vmul.f32 %v201, %v209
    %v221 = vpack.c.bf16 %v216, %v215
    %v222 = vpack.c.bf16 %v217, %v217
    %v223 = vpack.c.bf16 %v219, %v218
    %v224 = vpack.c.bf16 %v220, %v220
    %229 = vrot.lane.b32.xlu0 %v221, 126
    %v230 = vpop.permute.xlu0 %229
    %231 = vrot.lane.b32.xlu0 %v222, 126
    %v232 = vpop.permute.xlu0 %231
    %233 = vrot.lane.b32.xlu0 %v223, 126
    %v234 = vpop.permute.xlu0 %233
    %235 = vrot.lane.b32.xlu0 %v224, 126
    %v236 = vpop.permute.xlu0 %235
    %v237 = vrot.slane %v230, 4
    %v238 = vrot.slane %v232, 4
    %v239 = vrot.slane %v234, 4
    %v240 = vrot.slane %v236, 4
    %v241 = vsel %vm169, %v237, %v238
    %vm242 = vcmask 1031168
    %v243 = vsel %vm242, %v230, %v241
    %v244 = vsel %vm169, %v239, %v240
    %v245 = vsel %vm242, %v234, %v244
    %248 = vst [vmem:[#allocation3 + $0x40] sm:$0xff] %v243
    %249 = vst [vmem:[#allocation3 + $0x50] sm:$0xff] %v245
    %v250 = vld [vmem:[#allocation2] sm:$0xff]
    %v251 = vld [vmem:[#allocation2 + $0x8] sm:$0xf]
    %v252 = vld [vmem:[#allocation2 + $0xc] sm:$0xff]
    %v253 = vld [vmem:[#allocation2 + $0x14] sm:$0xf]
    %v254 = vld [vmem:[%s5] sm:$0x3]
    %256 = vst [vmem:[#allocation1] ss:$9 sm:$0xff] %v254
    %v257 = vld [vmem:[#allocation1] sm:$0xff]
    %v258 = vld [vmem:[#allocation1 + $0x9] sm:$0xff]
    %v259 = vpack.i.b16 %v257, %v257
    %v261 = vperm.slane %v259, 0
    %v262 = vpack.i.b16 %v258, %v258
    %v264 = vperm.slane %v262, 0
    %v265 = vunpack.c.l.bf16 %v250
    %v266 = vunpack.c.h.bf16 %v250
    %v267 = vunpack.c.l.bf16 %v251
    %v268 = vunpack.c.l.bf16 %v252
    %v269 = vunpack.c.h.bf16 %v252
    %v270 = vunpack.c.l.bf16 %v253
    %v271 = vunpack.c.l.bf16 %v261
    %v272 = vunpack.c.l.bf16 %v264
    %275 = vrot.lane.b32.xlu0 %v271, 16
    %v276 = vpop.permute.xlu0 %275
    %277 = vrot.lane.b32.xlu0 %v272, 16
    %v278 = vpop.permute.xlu0 %277
    %vm279 = vcmask 130048
    %v280 = vsel %vm279, %v276, %v278
    %v284 = vmul.f32 %v265, %v276
    %v285 = vmul.f32 %v266, %v280
    %v286 = vmul.f32 %v267, %v278
    %v287 = vmul.f32 %v268, %v276
    %v288 = vmul.f32 %v269, %v280
    %v289 = vmul.f32 %v270, %v278
    %v290 = vpack.c.bf16 %v285, %v284
    %v291 = vpack.c.bf16 %v286, %v286
    %v292 = vpack.c.bf16 %v288, %v287
    %v293 = vpack.c.bf16 %v289, %v289
    %298 = vrot.lane.b32.xlu0 %v290, 112
    %v299 = vpop.permute.xlu0 %298
    %300 = vrot.lane.b32.xlu0 %v291, 112
    %v301 = vpop.permute.xlu0 %300
    %302 = vrot.lane.b32.xlu0 %v292, 112
    %v303 = vpop.permute.xlu0 %302
    %304 = vrot.lane.b32.xlu0 %v293, 112
    %v305 = vpop.permute.xlu0 %304
    %v306 = vrot.slane %v299, 4
    %v307 = vrot.slane %v301, 4
    %v308 = vrot.slane %v303, 4
    %v309 = vrot.slane %v305, 4
    %v310 = vsel %vm169, %v306, %v307
    %vm311 = vcmask 916480
    %v312 = vsel %vm311, %v299, %v310
    %v313 = vsel %vm169, %v308, %v309
    %v314 = vsel %vm311, %v303, %v313
    %317 = vst [vmem:[#allocation3 + $0x60] sm:$0xff] %v312
    %318 = vst [vmem:[#allocation3 + $0x70] sm:$0xff] %v314
    %v319 = vld [vmem:[#allocation2] sm:$0xff]
    %v320 = vld [vmem:[#allocation2 + $0x8] sm:$0xf]
    %v321 = vld [vmem:[#allocation2 + $0xc] sm:$0xff]
    %v322 = vld [vmem:[#allocation2 + $0x14] sm:$0xf]
    %327 = vrot.lane.b32.xlu0 %v319, 111
    %v328 = vpop.permute.xlu0 %327
    %329 = vrot.lane.b32.xlu0 %v320, 111
    %v330 = vpop.permute.xlu0 %329
    %331 = vrot.lane.b32.xlu0 %v321, 111
    %v332 = vpop.permute.xlu0 %331
    %333 = vrot.lane.b32.xlu0 %v322, 111
    %v334 = vpop.permute.xlu0 %333
    %v335 = vrot.slane %v328, 4
    %v336 = vrot.slane %v330, 4
    %v337 = vrot.slane %v332, 4
    %v338 = vrot.slane %v334, 4
    %v339 = vsel %vm169, %v335, %v336
    %vm340 = vcmask 908288
    %v341 = vsel %vm340, %v328, %v339
    %v342 = vsel %vm169, %v337, %v338
    %v343 = vsel %vm340, %v332, %v342
    %346 = vst [vmem:[#allocation3 + $0x80] sm:$0xff] %v341
    %347 = vst [vmem:[#allocation3 + $0x90] sm:$0xff] %v343
    %v348 = vld [vmem:[#allocation2] sm:$0xff]
    %v349 = vld [vmem:[#allocation2 + $0x8] sm:$0xf]
    %v350 = vld [vmem:[#allocation2 + $0xc] sm:$0xff]
    %v351 = vld [vmem:[#allocation2 + $0x14] sm:$0xf]
    %v352 = vld [vmem:[%s5] sm:$0x3]
    %354 = vst [vmem:[#allocation1] ss:$9 sm:$0xff] %v352
    %v355 = vld [vmem:[#allocation1] sm:$0xff]
    %v356 = vld [vmem:[#allocation1 + $0x9] sm:$0xff]
    %v357 = vshrl.u32 %v355, 16
    %v358 = vpack.i.b16 %v357, %v357
    %v360 = vperm.slane %v358, 0
    %v361 = vshrl.u32 %v356, 16
    %v362 = vpack.i.b16 %v361, %v361
    %v364 = vperm.slane %v362, 0
    %v365 = vunpack.c.l.bf16 %v348
    %v366 = vunpack.c.h.bf16 %v348
    %v367 = vunpack.c.l.bf16 %v349
    %v368 = vunpack.c.l.bf16 %v350
    %v369 = vunpack.c.h.bf16 %v350
    %v370 = vunpack.c.l.bf16 %v351
    %v371 = vunpack.c.l.bf16 %v360
    %v372 = vunpack.c.l.bf16 %v364
    %375 = vrot.lane.b32.xlu0 %v371, 18
    %v376 = vpop.permute.xlu0 %375
    %377 = vrot.lane.b32.xlu0 %v372, 18
    %v378 = vpop.permute.xlu0 %377
    %vm379 = vcmask 146432
    %v380 = vsel %vm379, %v376, %v378
    %v384 = vmul.f32 %v365, %v376
    %v385 = vmul.f32 %v366, %v380
    %v386 = vmul.f32 %v367, %v378
    %v387 = vmul.f32 %v368, %v376
    %v388 = vmul.f32 %v369, %v380
    %v389 = vmul.f32 %v370, %v378
    %v390 = vpack.c.bf16 %v385, %v384
    %v391 = vpack.c.bf16 %v386, %v386
    %v392 = vpack.c.bf16 %v388, %v387
    %v393 = vpack.c.bf16 %v389, %v389
    %398 = vrot.lane.b32.xlu0 %v390, 110
    %v399 = vpop.permute.xlu0 %398
    %400 = vrot.lane.b32.xlu0 %v391, 110
    %v401 = vpop.permute.xlu0 %400
    %402 = vrot.lane.b32.xlu0 %v392, 110
    %v403 = vpop.permute.xlu0 %402
    %404 = vrot.lane.b32.xlu0 %v393, 110
    %v405 = vpop.permute.xlu0 %404
    %v406 = vrot.slane %v399, 4
    %v407 = vrot.slane %v401, 4
    %v408 = vrot.slane %v403, 4
    %v409 = vrot.slane %v405, 4
    %v410 = vsel %vm169, %v406, %v407
    %vm411 = vcmask 900096
    %v412 = vsel %vm411, %v399, %v410
    %v413 = vsel %vm169, %v408, %v409
    %v414 = vsel %vm411, %v403, %v413
    %417 = vst [vmem:[#allocation3 + $0xa0] sm:$0xff] %v412
    %418 = vst [vmem:[#allocation3 + $0xb0] sm:$0xff] %v414
    %v419 = vld [vmem:[#allocation2] sm:$0xff]
    %v420 = vld [vmem:[#allocation2 + $0x8] sm:$0xf]
    %v421 = vld [vmem:[#allocation2 + $0xc] sm:$0xff]
    %v422 = vld [vmem:[#allocation2 + $0x14] sm:$0xf]
    %v423 = vld [vmem:[%s5] sm:$0x3]
    %425 = vst [vmem:[#allocation1] ss:$9 sm:$0xff] %v423
    %v426 = vld [vmem:[#allocation1] sm:$0xff]
    %v427 = vld [vmem:[#allocation1 + $0x9] sm:$0xff]
    %v428 = vpack.i.b16 %v426, %v426
    %v430 = vperm.slane %v428, 0
    %v431 = vpack.i.b16 %v427, %v427
    %v433 = vperm.slane %v431, 0
    %v434 = vunpack.c.l.bf16 %v419
    %v435 = vunpack.c.h.bf16 %v419
    %v436 = vunpack.c.l.bf16 %v420
    %v437 = vunpack.c.l.bf16 %v421
    %v438 = vunpack.c.h.bf16 %v421
    %v439 = vunpack.c.l.bf16 %v422
    %v440 = vunpack.c.l.bf16 %v430
    %v441 = vunpack.c.l.bf16 %v433
    %444 = vrot.lane.b32.xlu0 %v440, 32
    %v445 = vpop.permute.xlu0 %444
    %446 = vrot.lane.b32.xlu0 %v441, 32
    %v447 = vpop.permute.xlu0 %446
    %vm448 = vcmask 261120
    %v449 = vsel %vm448, %v445, %v447
    %v453 = vmul.f32 %v434, %v445
    %v454 = vmul.f32 %v435, %v449
    %v455 = vmul.f32 %v436, %v447
    %v456 = vmul.f32 %v437, %v445
    %v457 = vmul.f32 %v438, %v449
    %v458 = vmul.f32 %v439, %v447
    %v459 = vpack.c.bf16 %v454, %v453
    %v460 = vpack.c.bf16 %v455, %v455
    %v461 = vpack.c.bf16 %v457, %v456
    %v462 = vpack.c.bf16 %v458, %v458
    %467 = vrot.lane.b32.xlu0 %v459, 96
    %v468 = vpop.permute.xlu0 %467
    %469 = vrot.lane.b32.xlu0 %v460, 96
    %v470 = vpop.permute.xlu0 %469
    %471 = vrot.lane.b32.xlu0 %v461, 96
    %v472 = vpop.permute.xlu0 %471
    %473 = vrot.lane.b32.xlu0 %v462, 96
    %v474 = vpop.permute.xlu0 %473
    %v475 = vrot.slane %v468, 4
    %v476 = vrot.slane %v470, 4
    %v477 = vrot.slane %v472, 4
    %v478 = vrot.slane %v474, 4
    %v479 = vsel %vm169, %v475, %v476
    %vm480 = vcmask 785408
    %v481 = vsel %vm480, %v468, %v479
    %v482 = vsel %vm169, %v477, %v478
    %v483 = vsel %vm480, %v472, %v482
    %486 = vst [vmem:[#allocation3 + $0xc0] sm:$0xff] %v481
    %487 = vst [vmem:[#allocation3 + $0xd0] sm:$0xff] %v483
    %v488 = vld [vmem:[#allocation2] sm:$0xff]
    %v489 = vld [vmem:[#allocation2 + $0x8] sm:$0xf]
    %v490 = vld [vmem:[#allocation2 + $0xc] sm:$0xff]
    %v491 = vld [vmem:[#allocation2 + $0x14] sm:$0xf]
    %496 = vrot.lane.b32.xlu0 %v488, 95
    %v497 = vpop.permute.xlu0 %496
    %498 = vrot.lane.b32.xlu0 %v489, 95
    %v499 = vpop.permute.xlu0 %498
    %500 = vrot.lane.b32.xlu0 %v490, 95
    %v501 = vpop.permute.xlu0 %500
    %502 = vrot.lane.b32.xlu0 %v491, 95
    %v503 = vpop.permute.xlu0 %502
    %v504 = vrot.slane %v497, 4
    %v505 = vrot.slane %v499, 4
    %v506 = vrot.slane %v501, 4
    %v507 = vrot.slane %v503, 4
    %v508 = vsel %vm169, %v504, %v505
    %vm509 = vcmask 777216
    %v510 = vsel %vm509, %v497, %v508
    %v511 = vsel %vm169, %v506, %v507
    %v512 = vsel %vm509, %v501, %v511
    %515 = vst [vmem:[#allocation3 + $0xe0] sm:$0xff] %v510
    %516 = vst [vmem:[#allocation3 + $0xf0] sm:$0xff] %v512
    %v517 = vld [vmem:[#allocation2] sm:$0xff]
    %v518 = vld [vmem:[#allocation2 + $0x8] sm:$0xf]
    %v519 = vld [vmem:[#allocation2 + $0xc] sm:$0xff]
    %v520 = vld [vmem:[#allocation2 + $0x14] sm:$0xf]
    %v521 = vld [vmem:[%s5] sm:$0x3]
    %523 = vst [vmem:[#allocation1] ss:$9 sm:$0xff] %v521
    %v524 = vld [vmem:[#allocation1] sm:$0xff]
    %v525 = vld [vmem:[#allocation1 + $0x9] sm:$0xff]
    %v526 = vshrl.u32 %v524, 16
    %v527 = vpack.i.b16 %v526, %v526
    %v529 = vperm.slane %v527, 0
    %v530 = vshrl.u32 %v525, 16
    %v531 = vpack.i.b16 %v530, %v530
    %v533 = vperm.slane %v531, 0
    %v534 = vunpack.c.l.bf16 %v517
    %v535 = vunpack.c.h.bf16 %v517
    %v536 = vunpack.c.l.bf16 %v518
    %v537 = vunpack.c.l.bf16 %v519
    %v538 = vunpack.c.h.bf16 %v519
    %v539 = vunpack.c.l.bf16 %v520
    %v540 = vunpack.c.l.bf16 %v529
    %v541 = vunpack.c.l.bf16 %v533
    %544 = vrot.lane.b32.xlu0 %v540, 34
    %v545 = vpop.permute.xlu0 %544
    %546 = vrot.lane.b32.xlu0 %v541, 34
    %v547 = vpop.permute.xlu0 %546
    %vm548 = vcmask 277504
    %v549 = vsel %vm548, %v545, %v547
    %v553 = vmul.f32 %v534, %v545
    %v554 = vmul.f32 %v535, %v549
    %v555 = vmul.f32 %v536, %v547
    %v556 = vmul.f32 %v537, %v545
    %v557 = vmul.f32 %v538, %v549
    %v558 = vmul.f32 %v539, %v547
    %v559 = vpack.c.bf16 %v554, %v553
    %v560 = vpack.c.bf16 %v555, %v555
    %v561 = vpack.c.bf16 %v557, %v556
    %v562 = vpack.c.bf16 %v558, %v558
    %567 = vrot.lane.b32.xlu0 %v559, 94
    %v568 = vpop.permute.xlu0 %567
    %569 = vrot.lane.b32.xlu0 %v560, 94
    %v570 = vpop.permute.xlu0 %569
    %571 = vrot.lane.b32.xlu0 %v561, 94
    %v572 = vpop.permute.xlu0 %571
    %573 = vrot.lane.b32.xlu0 %v562, 94
    %v574 = vpop.permute.xlu0 %573
    %v575 = vrot.slane %v568, 4
    %v576 = vrot.slane %v570, 4
    %v577 = vrot.slane %v572, 4
    %v578 = vrot.slane %v574, 4
    %v579 = vsel %vm169, %v575, %v576
    %vm580 = vcmask 769024
    %v581 = vsel %vm580, %v568, %v579
    %v582 = vsel %vm169, %v577, %v578
    %v583 = vsel %vm580, %v572, %v582
    %586 = vst [vmem:[#allocation3 + $0x100] sm:$0xff] %v581
    %587 = vst [vmem:[#allocation3 + $0x110] sm:$0xff] %v583
    %s588 = scalar_lea.vmem [#allocation4], 16
    %v589 = vld [vmem:[%s588] sm:$0xff]
    %v590 = vld [vmem:[%s588 + $0x8] sm:$0xff]
    %v591 = vunpack.c.l.bf16 %v589
    %v592 = vunpack.c.h.bf16 %v589
    %v593 = vunpack.c.l.bf16 %v590
    %v594 = vunpack.c.h.bf16 %v590
    %s595 = scalar_lea.vmem [#allocation7], 16
    %v596 = vld [vmem:[%s595] sm:$0xff]
    %v597 = vld [vmem:[%s595 + $0x8] sm:$0xff]
    %v598 = vunpack.c.l.bf16 %v596
    %v599 = vunpack.c.h.bf16 %v596
    %v600 = vunpack.c.l.bf16 %v597
    %v601 = vunpack.c.h.bf16 %v597
    %v602 = vmul.f32 %v591, %v598
    %v603 = vmul.f32 %v592, %v599
    %v604 = vmul.f32 %v593, %v600
    %v605 = vmul.f32 %v594, %v601
    %v606 = vadd.f32 %v602, %v591
    %v607 = vadd.f32 %v603, %v592
    %v608 = vadd.f32 %v604, %v593
    %v609 = vadd.f32 %v605, %v594
    %v610 = vpack.c.bf16 %v607, %v606
    %v611 = vpack.c.bf16 %v609, %v608
    %614 = vrot.lane.b32.xlu0 %v610, 17
    %v615 = vpop.permute.xlu0 %614
    %616 = vrot.lane.b32.xlu0 %v611, 17
    %v617 = vpop.permute.xlu0 %616
    %v618 = vrot.slane %v615, 4
    %v619 = vrot.slane %v617, 4
    %v620 = vsel %vm108, %v618, %v615
    %v621 = vsel %vm108, %v619, %v617
    %626 = vst.msk [vmem:[#allocation2] sm:$0xff] %vm117, %v620
    %627 = vst.msk [vmem:[#allocation2 + $0x8] sm:$0xf] %vm72, %v618
    %628 = vst.msk [vmem:[#allocation2 + $0xc] sm:$0xff] %vm117, %v621
    %629 = vst.msk [vmem:[#allocation2 + $0x14] sm:$0xf] %vm72, %v619
    %v630 = vld [vmem:[#allocation2] sm:$0xff]
    %v631 = vld [vmem:[#allocation2 + $0xc] sm:$0xff]
    %v632 = vld [vmem:[%s5] sm:$0x3]
    %634 = vst [vmem:[#allocation1] ss:$9 sm:$0xff] %v632
    %v635 = vld [vmem:[#allocation1] sm:$0xff]
    %v636 = vld [vmem:[#allocation1 + $0x9] sm:$0xff]
    %v637 = vpack.i.b16 %v635, %v635
    %v639 = vperm.slane %v637, 0
    %v640 = vpack.i.b16 %v636, %v636
    %v642 = vperm.slane %v640, 0
    %v643 = vunpack.c.l.bf16 %v630
    %v644 = vunpack.c.h.bf16 %v630
    %v645 = vunpack.c.l.bf16 %v631
    %v646 = vunpack.c.h.bf16 %v631
    %v647 = vunpack.c.l.bf16 %v639
    %v648 = vunpack.c.l.bf16 %v642
    %v649 = vmul.f32 %v643, %v647
    %v650 = vmul.f32 %v644, %v648
    %v651 = vmul.f32 %v645, %v647
    %v652 = vmul.f32 %v646, %v648
    %v653 = vpack.c.bf16 %v650, %v649
    %v654 = vpack.c.bf16 %v652, %v651
    %655 = vst [vmem:[#allocation3 + $0x8] sm:$0xff] %v653
    %656 = vst [vmem:[#allocation3 + $0x18] sm:$0xff] %v654
    %v657 = vld [vmem:[#allocation2] sm:$0xff]
    %v658 = vld [vmem:[#allocation2 + $0x8] sm:$0xf]
    %v659 = vld [vmem:[#allocation2 + $0xc] sm:$0xff]
    %v660 = vld [vmem:[#allocation2 + $0x14] sm:$0xf]
    %665 = vrot.lane.b32.xlu0 %v657, 127
    %v666 = vpop.permute.xlu0 %665
    %667 = vrot.lane.b32.xlu0 %v658, 127
    %v668 = vpop.permute.xlu0 %667
    %669 = vrot.lane.b32.xlu0 %v659, 127
    %v670 = vpop.permute.xlu0 %669
    %671 = vrot.lane.b32.xlu0 %v660, 127
    %v672 = vpop.permute.xlu0 %671
    %v673 = vrot.slane %v666, 4
    %v674 = vrot.slane %v668, 4
    %v675 = vrot.slane %v670, 4
    %v676 = vrot.slane %v672, 4
    %v677 = vsel %vm169, %v673, %v674
    %v678 = vsel %vm171, %v666, %v677
    %v679 = vsel %vm169, %v675, %v676
    %v680 = vsel %vm171, %v670, %v679
    %683 = vst [vmem:[#allocation3 + $0x28] sm:$0xff] %v678
    %684 = vst [vmem:[#allocation3 + $0x38] sm:$0xff] %v680
    %v685 = vld [vmem:[#allocation2] sm:$0xff]
    %v686 = vld [vmem:[#allocation2 + $0x8] sm:$0xf]
    %v687 = vld [vmem:[#allocation2 + $0xc] sm:$0xff]
    %v688 = vld [vmem:[#allocation2 + $0x14] sm:$0xf]
    %v689 = vld [vmem:[%s5] sm:$0x3]
    %691 = vst [vmem:[#allocation1] ss:$9 sm:$0xff] %v689
    %v692 = vld [vmem:[#allocation1] sm:$0xff]
    %v693 = vld [vmem:[#allocation1 + $0x9] sm:$0xff]
    %v694 = vshrl.u32 %v692, 16
    %v695 = vpack.i.b16 %v694, %v694
    %v697 = vperm.slane %v695, 0
    %v698 = vshrl.u32 %v693, 16
    %v699 = vpack.i.b16 %v698, %v698
    %v701 = vperm.slane %v699, 0
    %v702 = vunpack.c.l.bf16 %v685
    %v703 = vunpack.c.h.bf16 %v685
    %v704 = vunpack.c.l.bf16 %v686
    %v705 = vunpack.c.l.bf16 %v687
    %v706 = vunpack.c.h.bf16 %v687
    %v707 = vunpack.c.l.bf16 %v688
    %v708 = vunpack.c.l.bf16 %v697
    %v709 = vunpack.c.l.bf16 %v701
    %712 = vrot.lane.b32.xlu0 %v708, 2
    %v713 = vpop.permute.xlu0 %712
    %714 = vrot.lane.b32.xlu0 %v709, 2
    %v715 = vpop.permute.xlu0 %714
    %v716 = vsel %vm210, %v713, %v715
    %v720 = vmul.f32 %v702, %v713
    %v721 = vmul.f32 %v703, %v716
    %v722 = vmul.f32 %v704, %v715
    %v723 = vmul.f32 %v705, %v713
    %v724 = vmul.f32 %v706, %v716
    %v725 = vmul.f32 %v707, %v715
    %v726 = vpack.c.bf16 %v721, %v720
    %v727 = vpack.c.bf16 %v722, %v722
    %v728 = vpack.c.bf16 %v724, %v723
    %v729 = vpack.c.bf16 %v725, %v725
    %734 = vrot.lane.b32.xlu0 %v726, 126
    %v735 = vpop.permute.xlu0 %734
    %736 = vrot.lane.b32.xlu0 %v727, 126
    %v737 = vpop.permute.xlu0 %736
    %738 = vrot.lane.b32.xlu0 %v728, 126
    %v739 = vpop.permute.xlu0 %738
    %740 = vrot.lane.b32.xlu0 %v729, 126
    %v741 = vpop.permute.xlu0 %740
    %v742 = vrot.slane %v735, 4
    %v743 = vrot.slane %v737, 4
    %v744 = vrot.slane %v739, 4
    %v745 = vrot.slane %v741, 4
    %v746 = vsel %vm169, %v742, %v743
    %v747 = vsel %vm242, %v735, %v746
    %v748 = vsel %vm169, %v744, %v745
    %v749 = vsel %vm242, %v739, %v748
    %752 = vst [vmem:[#allocation3 + $0x48] sm:$0xff] %v747
    %753 = vst [vmem:[#allocation3 + $0x58] sm:$0xff] %v749
    %v754 = vld [vmem:[#allocation2] sm:$0xff]
    %v755 = vld [vmem:[#allocation2 + $0x8] sm:$0xf]
    %v756 = vld [vmem:[#allocation2 + $0xc] sm:$0xff]
    %v757 = vld [vmem:[#allocation2 + $0x14] sm:$0xf]
    %v758 = vld [vmem:[%s5] sm:$0x3]
    %760 = vst [vmem:[#allocation1] ss:$9 sm:$0xff] %v758
    %v761 = vld [vmem:[#allocation1] sm:$0xff]
    %v762 = vld [vmem:[#allocation1 + $0x9] sm:$0xff]
    %v763 = vpack.i.b16 %v761, %v761
    %v765 = vperm.slane %v763, 0
    %v766 = vpack.i.b16 %v762, %v762
    %v768 = vperm.slane %v766, 0
    %v769 = vunpack.c.l.bf16 %v754
    %v770 = vunpack.c.h.bf16 %v754
    %v771 = vunpack.c.l.bf16 %v755
    %v772 = vunpack.c.l.bf16 %v756
    %v773 = vunpack.c.h.bf16 %v756
    %v774 = vunpack.c.l.bf16 %v757
    %v775 = vunpack.c.l.bf16 %v765
    %v776 = vunpack.c.l.bf16 %v768
    %779 = vrot.lane.b32.xlu0 %v775, 16
    %v780 = vpop.permute.xlu0 %779
    %781 = vrot.lane.b32.xlu0 %v776, 16
    %v782 = vpop.permute.xlu0 %781
    %v783 = vsel %vm279, %v780, %v782
    %v787 = vmul.f32 %v769, %v780
    %v788 = vmul.f32 %v770, %v783
    %v789 = vmul.f32 %v771, %v782
    %v790 = vmul.f32 %v772, %v780
    %v791 = vmul.f32 %v773, %v783
    %v792 = vmul.f32 %v774, %v782
    %v793 = vpack.c.bf16 %v788, %v787
    %v794 = vpack.c.bf16 %v789, %v789
    %v795 = vpack.c.bf16 %v791, %v790
    %v796 = vpack.c.bf16 %v792, %v792
    %801 = vrot.lane.b32.xlu0 %v793, 112
    %v802 = vpop.permute.xlu0 %801
    %803 = vrot.lane.b32.xlu0 %v794, 112
    %v804 = vpop.permute.xlu0 %803
    %805 = vrot.lane.b32.xlu0 %v795, 112
    %v806 = vpop.permute.xlu0 %805
    %807 = vrot.lane.b32.xlu0 %v796, 112
    %v808 = vpop.permute.xlu0 %807
    %v809 = vrot.slane %v802, 4
    %v810 = vrot.slane %v804, 4
    %v811 = vrot.slane %v806, 4
    %v812 = vrot.slane %v808, 4
    %v813 = vsel %vm169, %v809, %v810
    %v814 = vsel %vm311, %v802, %v813
    %v815 = vsel %vm169, %v811, %v812
    %v816 = vsel %vm311, %v806, %v815
    %819 = vst [vmem:[#allocation3 + $0x68] sm:$0xff] %v814
    %820 = vst [vmem:[#allocation3 + $0x78] sm:$0xff] %v816
    %v821 = vld [vmem:[#allocation2] sm:$0xff]
    %v822 = vld [vmem:[#allocation2 + $0x8] sm:$0xf]
    %v823 = vld [vmem:[#allocation2 + $0xc] sm:$0xff]
    %v824 = vld [vmem:[#allocation2 + $0x14] sm:$0xf]
    %829 = vrot.lane.b32.xlu0 %v821, 111
    %v830 = vpop.permute.xlu0 %829
    %831 = vrot.lane.b32.xlu0 %v822, 111
    %v832 = vpop.permute.xlu0 %831
    %833 = vrot.lane.b32.xlu0 %v823, 111
    %v834 = vpop.permute.xlu0 %833
    %835 = vrot.lane.b32.xlu0 %v824, 111
    %v836 = vpop.permute.xlu0 %835
    %v837 = vrot.slane %v830, 4
    %v838 = vrot.slane %v832, 4
    %v839 = vrot.slane %v834, 4
    %v840 = vrot.slane %v836, 4
    %v841 = vsel %vm169, %v837, %v838
    %v842 = vsel %vm340, %v830, %v841
    %v843 = vsel %vm169, %v839, %v840
    %v844 = vsel %vm340, %v834, %v843
    %847 = vst [vmem:[#allocation3 + $0x88] sm:$0xff] %v842
    %848 = vst [vmem:[#allocation3 + $0x98] sm:$0xff] %v844
    %v849 = vld [vmem:[#allocation2] sm:$0xff]
    %v850 = vld [vmem:[#allocation2 + $0x8] sm:$0xf]
    %v851 = vld [vmem:[#allocation2 + $0xc] sm:$0xff]
    %v852 = vld [vmem:[#allocation2 + $0x14] sm:$0xf]
    %v853 = vld [vmem:[%s5] sm:$0x3]
    %855 = vst [vmem:[#allocation1] ss:$9 sm:$0xff] %v853
    %v856 = vld [vmem:[#allocation1] sm:$0xff]
    %v857 = vld [vmem:[#allocation1 + $0x9] sm:$0xff]
    %v858 = vshrl.u32 %v856, 16
    %v859 = vpack.i.b16 %v858, %v858
    %v861 = vperm.slane %v859, 0
    %v862 = vshrl.u32 %v857, 16
    %v863 = vpack.i.b16 %v862, %v862
    %v865 = vperm.slane %v863, 0
    %v866 = vunpack.c.l.bf16 %v849
    %v867 = vunpack.c.h.bf16 %v849
    %v868 = vunpack.c.l.bf16 %v850
    %v869 = vunpack.c.l.bf16 %v851
    %v870 = vunpack.c.h.bf16 %v851
    %v871 = vunpack.c.l.bf16 %v852
    %v872 = vunpack.c.l.bf16 %v861
    %v873 = vunpack.c.l.bf16 %v865
    %876 = vrot.lane.b32.xlu0 %v872, 18
    %v877 = vpop.permute.xlu0 %876
    %878 = vrot.lane.b32.xlu0 %v873, 18
    %v879 = vpop.permute.xlu0 %878
    %v880 = vsel %vm379, %v877, %v879
    %v884 = vmul.f32 %v866, %v877
    %v885 = vmul.f32 %v867, %v880
    %v886 = vmul.f32 %v868, %v879
    %v887 = vmul.f32 %v869, %v877
    %v888 = vmul.f32 %v870, %v880
    %v889 = vmul.f32 %v871, %v879
    %v890 = vpack.c.bf16 %v885, %v884
    %v891 = vpack.c.bf16 %v886, %v886
    %v892 = vpack.c.bf16 %v888, %v887
    %v893 = vpack.c.bf16 %v889, %v889
    %898 = vrot.lane.b32.xlu0 %v890, 110
    %v899 = vpop.permute.xlu0 %898
    %900 = vrot.lane.b32.xlu0 %v891, 110
    %v901 = vpop.permute.xlu0 %900
    %902 = vrot.lane.b32.xlu0 %v892, 110
    %v903 = vpop.permute.xlu0 %902
    %904 = vrot.lane.b32.xlu0 %v893, 110
    %v905 = vpop.permute.xlu0 %904
    %v906 = vrot.slane %v899, 4
    %v907 = vrot.slane %v901, 4
    %v908 = vrot.slane %v903, 4
    %v909 = vrot.slane %v905, 4
    %v910 = vsel %vm169, %v906, %v907
    %v911 = vsel %vm411, %v899, %v910
    %v912 = vsel %vm169, %v908, %v909
    %v913 = vsel %vm411, %v903, %v912
    %916 = vst [vmem:[#allocation3 + $0xa8] sm:$0xff] %v911
    %917 = vst [vmem:[#allocation3 + $0xb8] sm:$0xff] %v913
    %v918 = vld [vmem:[#allocation2] sm:$0xff]
    %v919 = vld [vmem:[#allocation2 + $0x8] sm:$0xf]
    %v920 = vld [vmem:[#allocation2 + $0xc] sm:$0xff]
    %v921 = vld [vmem:[#allocation2 + $0x14] sm:$0xf]
    %v922 = vld [vmem:[%s5] sm:$0x3]
    %924 = vst [vmem:[#allocation1] ss:$9 sm:$0xff] %v922
    %v925 = vld [vmem:[#allocation1] sm:$0xff]
    %v926 = vld [vmem:[#allocation1 + $0x9] sm:$0xff]
    %v927 = vpack.i.b16 %v925, %v925
    %v929 = vperm.slane %v927, 0
    %v930 = vpack.i.b16 %v926, %v926
    %v932 = vperm.slane %v930, 0
    %v933 = vunpack.c.l.bf16 %v918
    %v934 = vunpack.c.h.bf16 %v918
    %v935 = vunpack.c.l.bf16 %v919
    %v936 = vunpack.c.l.bf16 %v920
    %v937 = vunpack.c.h.bf16 %v920
    %v938 = vunpack.c.l.bf16 %v921
    %v939 = vunpack.c.l.bf16 %v929
    %v940 = vunpack.c.l.bf16 %v932
    %943 = vrot.lane.b32.xlu0 %v939, 32
    %v944 = vpop.permute.xlu0 %943
    %945 = vrot.lane.b32.xlu0 %v940, 32
    %v946 = vpop.permute.xlu0 %945
    %v947 = vsel %vm448, %v944, %v946
    %v951 = vmul.f32 %v933, %v944
    %v952 = vmul.f32 %v934, %v947
    %v953 = vmul.f32 %v935, %v946
    %v954 = vmul.f32 %v936, %v944
    %v955 = vmul.f32 %v937, %v947
    %v956 = vmul.f32 %v938, %v946
    %v957 = vpack.c.bf16 %v952, %v951
    %v958 = vpack.c.bf16 %v953, %v953
    %v959 = vpack.c.bf16 %v955, %v954
    %v960 = vpack.c.bf16 %v956, %v956
    %965 = vrot.lane.b32.xlu0 %v957, 96
    %v966 = vpop.permute.xlu0 %965
    %967 = vrot.lane.b32.xlu0 %v958, 96
    %v968 = vpop.permute.xlu0 %967
    %969 = vrot.lane.b32.xlu0 %v959, 96
    %v970 = vpop.permute.xlu0 %969
    %971 = vrot.lane.b32.xlu0 %v960, 96
    %v972 = vpop.permute.xlu0 %971
    %v973 = vrot.slane %v966, 4
    %v974 = vrot.slane %v968, 4
    %v975 = vrot.slane %v970, 4
    %v976 = vrot.slane %v972, 4
    %v977 = vsel %vm169, %v973, %v974
    %v978 = vsel %vm480, %v966, %v977
    %v979 = vsel %vm169, %v975, %v976
    %v980 = vsel %vm480, %v970, %v979
    %983 = vst [vmem:[#allocation3 + $0xc8] sm:$0xff] %v978
    %984 = vst [vmem:[#allocation3 + $0xd8] sm:$0xff] %v980
    %v985 = vld [vmem:[#allocation2] sm:$0xff]
    %v986 = vld [vmem:[#allocation2 + $0x8] sm:$0xf]
    %v987 = vld [vmem:[#allocation2 + $0xc] sm:$0xff]
    %v988 = vld [vmem:[#allocation2 + $0x14] sm:$0xf]
    %993 = vrot.lane.b32.xlu0 %v985, 95
    %v994 = vpop.permute.xlu0 %993
    %995 = vrot.lane.b32.xlu0 %v986, 95
    %v996 = vpop.permute.xlu0 %995
    %997 = vrot.lane.b32.xlu0 %v987, 95
    %v998 = vpop.permute.xlu0 %997
    %999 = vrot.lane.b32.xlu0 %v988, 95
    %v1000 = vpop.permute.xlu0 %999
    %v1001 = vrot.slane %v994, 4
    %v1002 = vrot.slane %v996, 4
    %v1003 = vrot.slane %v998, 4
    %v1004 = vrot.slane %v1000, 4
    %v1005 = vsel %vm169, %v1001, %v1002
    %v1006 = vsel %vm509, %v994, %v1005
    %v1007 = vsel %vm169, %v1003, %v1004
    %v1008 = vsel %vm509, %v998, %v1007
    %1011 = vst [vmem:[#allocation3 + $0xe8] sm:$0xff] %v1006
    %1012 = vst [vmem:[#allocation3 + $0xf8] sm:$0xff] %v1008
    %v1013 = vld [vmem:[#allocation2] sm:$0xff]
    %v1014 = vld [vmem:[#allocation2 + $0x8] sm:$0xf]
    %v1015 = vld [vmem:[#allocation2 + $0xc] sm:$0xff]
    %v1016 = vld [vmem:[#allocation2 + $0x14] sm:$0xf]
    %v1017 = vld [vmem:[%s5] sm:$0x3]
    %1019 = vst [vmem:[#allocation1] ss:$9 sm:$0xff] %v1017
    %v1020 = vld [vmem:[#allocation1] sm:$0xff]
    %v1021 = vld [vmem:[#allocation1 + $0x9] sm:$0xff]
    %v1022 = vshrl.u32 %v1020, 16
    %v1023 = vpack.i.b16 %v1022, %v1022
    %v1025 = vperm.slane %v1023, 0
    %v1026 = vshrl.u32 %v1021, 16
    %v1027 = vpack.i.b16 %v1026, %v1026
    %v1029 = vperm.slane %v1027, 0
    %v1030 = vunpack.c.l.bf16 %v1013
    %v1031 = vunpack.c.h.bf16 %v1013
    %v1032 = vunpack.c.l.bf16 %v1014
    %v1033 = vunpack.c.l.bf16 %v1015
    %v1034 = vunpack.c.h.bf16 %v1015
    %v1035 = vunpack.c.l.bf16 %v1016
    %v1036 = vunpack.c.l.bf16 %v1025
    %v1037 = vunpack.c.l.bf16 %v1029
    %1040 = vrot.lane.b32.xlu0 %v1036, 34
    %v1041 = vpop.permute.xlu0 %1040
    %1042 = vrot.lane.b32.xlu0 %v1037, 34
    %v1043 = vpop.permute.xlu0 %1042
    %v1044 = vsel %vm548, %v1041, %v1043
    %v1048 = vmul.f32 %v1030, %v1041
    %v1049 = vmul.f32 %v1031, %v1044
    %v1050 = vmul.f32 %v1032, %v1043
    %v1051 = vmul.f32 %v1033, %v1041
    %v1052 = vmul.f32 %v1034, %v1044
    %v1053 = vmul.f32 %v1035, %v1043
    %v1054 = vpack.c.bf16 %v1049, %v1048
    %v1055 = vpack.c.bf16 %v1050, %v1050
    %v1056 = vpack.c.bf16 %v1052, %v1051
    %v1057 = vpack.c.bf16 %v1053, %v1053
    %1062 = vrot.lane.b32.xlu0 %v1054, 94
    %v1063 = vpop.permute.xlu0 %1062
    %1064 = vrot.lane.b32.xlu0 %v1055, 94
    %v1065 = vpop.permute.xlu0 %1064
    %1066 = vrot.lane.b32.xlu0 %v1056, 94
    %v1067 = vpop.permute.xlu0 %1066
    %1068 = vrot.lane.b32.xlu0 %v1057, 94
    %v1069 = vpop.permute.xlu0 %1068
    %v1070 = vrot.slane %v1063, 4
    %v1071 = vrot.slane %v1065, 4
    %v1072 = vrot.slane %v1067, 4
    %v1073 = vrot.slane %v1069, 4
    %v1074 = vsel %vm169, %v1070, %v1071
    %v1075 = vsel %vm580, %v1063, %v1074
    %v1076 = vsel %vm169, %v1072, %v1073
    %v1077 = vsel %vm580, %v1067, %v1076
    %1080 = vst [vmem:[#allocation3 + $0x108] sm:$0xff] %v1075
    %1081 = vst [vmem:[#allocation3 + $0x118] sm:$0xff] %v1077
    %v1082 = vld [vmem:[%s2] sm:$0xff]
    %v1083 = vld [vmem:[%s2 + $0x8] sm:$0xff]
    %v1084 = vld [vmem:[#allocation3] sm:$0xff]
    %v1085 = vld [vmem:[#allocation3 + $0x8] sm:$0xff]
    %v1086 = vld [vmem:[#allocation3 + $0x10] sm:$0xff]
    %v1087 = vld [vmem:[#allocation3 + $0x18] sm:$0xff]
    %v1088 = vld [vmem:[#allocation3 + $0x20] sm:$0xff]
    %v1089 = vld [vmem:[#allocation3 + $0x28] sm:$0xff]
    %v1090 = vld [vmem:[#allocation3 + $0x30] sm:$0xff]
    %v1091 = vld [vmem:[#allocation3 + $0x38] sm:$0xff]
    %v1092 = vld [vmem:[#allocation3 + $0x40] sm:$0xff]
    %v1093 = vld [vmem:[#allocation3 + $0x48] sm:$0xff]
    %v1094 = vld [vmem:[#allocation3 + $0x50] sm:$0xff]
    %v1095 = vld [vmem:[#allocation3 + $0x58] sm:$0xff]
    %v1096 = vld [vmem:[#allocation3 + $0x60] sm:$0xff]
    %v1097 = vld [vmem:[#allocation3 + $0x68] sm:$0xff]
    %v1098 = vld [vmem:[#allocation3 + $0x70] sm:$0xff]
    %v1099 = vld [vmem:[#allocation3 + $0x78] sm:$0xff]
    %v1100 = vld [vmem:[#allocation3 + $0x80] sm:$0xff]
    %v1101 = vld [vmem:[#allocation3 + $0x88] sm:$0xff]
    %v1102 = vld [vmem:[#allocation3 + $0x90] sm:$0xff]
    %v1103 = vld [vmem:[#allocation3 + $0x98] sm:$0xff]
    %v1104 = vld [vmem:[#allocation3 + $0xa0] sm:$0xff]
    %v1105 = vld [vmem:[#allocation3 + $0xa8] sm:$0xff]
    %v1106 = vld [vmem:[#allocation3 + $0xb0] sm:$0xff]
    %v1107 = vld [vmem:[#allocation3 + $0xb8] sm:$0xff]
    %v1108 = vld [vmem:[#allocation3 + $0xc0] sm:$0xff]
    %v1109 = vld [vmem:[#allocation3 + $0xc8] sm:$0xff]
    %v1110 = vld [vmem:[#allocation3 + $0xd0] sm:$0xff]
    %v1111 = vld [vmem:[#allocation3 + $0xd8] sm:$0xff]
    %v1112 = vld [vmem:[#allocation3 + $0xe0] sm:$0xff]
    %v1113 = vld [vmem:[#allocation3 + $0xe8] sm:$0xff]
    %v1114 = vld [vmem:[#allocation3 + $0xf0] sm:$0xff]
    %v1115 = vld [vmem:[#allocation3 + $0xf8] sm:$0xff]
    %v1116 = vld [vmem:[#allocation3 + $0x100] sm:$0xff]
    %v1117 = vld [vmem:[#allocation3 + $0x108] sm:$0xff]
    %v1118 = vld [vmem:[#allocation3 + $0x110] sm:$0xff]
    %v1119 = vld [vmem:[#allocation3 + $0x118] sm:$0xff]
    %v1120 = vld [vmem:[%s3] sm:$0xff]
    %v1121 = vld [vmem:[%s3 + $0x8] sm:$0xff]
    %1123 = vset.pattern.permute.xlu0 0
    %1124 = vperm.xlu0 %1123, %v1120
    %v1125 = vpop.permute.xlu0 %1124
    %1128 = vset.pattern.permute.xlu0 0
    %1129 = vperm.xlu0 %1128, %v1121
    %v1130 = vpop.permute.xlu0 %1129
    %v1134 = vunpack.c.l.b16 %v1082
    %v1135 = vunpack.c.h.b16 %v1082
    %v1136 = vunpack.c.l.b16 %v1083
    %v1137 = vunpack.c.h.b16 %v1083
    %v1138 = vpack.c.b16 %v1136, %v1134
    %v1139 = vpack.c.b16 %v1137, %v1135
    %v1177 = vunpack.c.l.b16 %v1084
    %v1178 = vunpack.c.h.b16 %v1084
    %v1179 = vunpack.c.l.b16 %v1085
    %v1180 = vunpack.c.h.b16 %v1085
    %v1181 = vunpack.c.l.b16 %v1086
    %v1182 = vunpack.c.h.b16 %v1086
    %v1183 = vunpack.c.l.b16 %v1087
    %v1184 = vunpack.c.h.b16 %v1087
    %v1185 = vunpack.c.l.b16 %v1088
    %v1186 = vunpack.c.h.b16 %v1088
    %v1187 = vunpack.c.l.b16 %v1089
    %v1188 = vunpack.c.h.b16 %v1089
    %v1189 = vunpack.c.l.b16 %v1090
    %v1190 = vunpack.c.h.b16 %v1090
    %v1191 = vunpack.c.l.b16 %v1091
    %v1192 = vunpack.c.h.b16 %v1091
    %v1193 = vunpack.c.l.b16 %v1092
    %v1194 = vunpack.c.h.b16 %v1092
    %v1195 = vunpack.c.l.b16 %v1093
    %v1196 = vunpack.c.h.b16 %v1093
    %v1197 = vunpack.c.l.b16 %v1094
    %v1198 = vunpack.c.h.b16 %v1094
    %v1199 = vunpack.c.l.b16 %v1095
    %v1200 = vunpack.c.h.b16 %v1095
    %v1201 = vunpack.c.l.b16 %v1096
    %v1202 = vunpack.c.h.b16 %v1096
    %v1203 = vunpack.c.l.b16 %v1097
    %v1204 = vunpack.c.h.b16 %v1097
    %v1205 = vunpack.c.l.b16 %v1098
    %v1206 = vunpack.c.h.b16 %v1098
    %v1207 = vunpack.c.l.b16 %v1099
    %v1208 = vunpack.c.h.b16 %v1099
    %v1209 = vunpack.c.l.b16 %v1100
    %v1210 = vunpack.c.h.b16 %v1100
    %v1211 = vunpack.c.l.b16 %v1101
    %v1212 = vunpack.c.h.b16 %v1101
    %v1213 = vunpack.c.l.b16 %v1102
    %v1214 = vunpack.c.h.b16 %v1102
    %v1215 = vunpack.c.l.b16 %v1103
    %v1216 = vunpack.c.h.b16 %v1103
    %v1217 = vunpack.c.l.b16 %v1104
    %v1218 = vunpack.c.h.b16 %v1104
    %v1219 = vunpack.c.l.b16 %v1105
    %v1220 = vunpack.c.h.b16 %v1105
    %v1221 = vunpack.c.l.b16 %v1106
    %v1222 = vunpack.c.h.b16 %v1106
    %v1223 = vunpack.c.l.b16 %v1107
    %v1224 = vunpack.c.h.b16 %v1107
    %v1225 = vunpack.c.l.b16 %v1108
    %v1226 = vunpack.c.h.b16 %v1108
    %v1227 = vunpack.c.l.b16 %v1109
    %v1228 = vunpack.c.h.b16 %v1109
    %v1229 = vunpack.c.l.b16 %v1110
    %v1230 = vunpack.c.h.b16 %v1110
    %v1231 = vunpack.c.l.b16 %v1111
    %v1232 = vunpack.c.h.b16 %v1111
    %v1233 = vunpack.c.l.b16 %v1112
    %v1234 = vunpack.c.h.b16 %v1112
    %v1235 = vunpack.c.l.b16 %v1113
    %v1236 = vunpack.c.h.b16 %v1113
    %v1237 = vunpack.c.l.b16 %v1114
    %v1238 = vunpack.c.h.b16 %v1114
    %v1239 = vunpack.c.l.b16 %v1115
    %v1240 = vunpack.c.h.b16 %v1115
    %v1241 = vunpack.c.l.b16 %v1116
    %v1242 = vunpack.c.h.b16 %v1116
    %v1243 = vunpack.c.l.b16 %v1117
    %v1244 = vunpack.c.h.b16 %v1117
    %v1245 = vunpack.c.l.b16 %v1118
    %v1246 = vunpack.c.h.b16 %v1118
    %v1247 = vunpack.c.l.b16 %v1119
    %v1248 = vunpack.c.h.b16 %v1119
    %v1249 = vpack.c.b16 %v1181, %v1177
    %v1250 = vpack.c.b16 %v1182, %v1178
    %v1251 = vpack.c.b16 %v1183, %v1179
    %v1252 = vpack.c.b16 %v1184, %v1180
    %v1253 = vpack.c.b16 %v1189, %v1185
    %v1254 = vpack.c.b16 %v1190, %v1186
    %v1255 = vpack.c.b16 %v1191, %v1187
    %v1256 = vpack.c.b16 %v1192, %v1188
    %v1257 = vpack.c.b16 %v1197, %v1193
    %v1258 = vpack.c.b16 %v1198, %v1194
    %v1259 = vpack.c.b16 %v1199, %v1195
    %v1260 = vpack.c.b16 %v1200, %v1196
    %v1261 = vpack.c.b16 %v1205, %v1201
    %v1262 = vpack.c.b16 %v1206, %v1202
    %v1263 = vpack.c.b16 %v1207, %v1203
    %v1264 = vpack.c.b16 %v1208, %v1204
    %v1265 = vpack.c.b16 %v1213, %v1209
    %v1266 = vpack.c.b16 %v1214, %v1210
    %v1267 = vpack.c.b16 %v1215, %v1211
    %v1268 = vpack.c.b16 %v1216, %v1212
    %v1269 = vpack.c.b16 %v1221, %v1217
    %v1270 = vpack.c.b16 %v1222, %v1218
    %v1271 = vpack.c.b16 %v1223, %v1219
    %v1272 = vpack.c.b16 %v1224, %v1220
    %v1273 = vpack.c.b16 %v1229, %v1225
    %v1274 = vpack.c.b16 %v1230, %v1226
    %v1275 = vpack.c.b16 %v1231, %v1227
    %v1276 = vpack.c.b16 %v1232, %v1228
    %v1277 = vpack.c.b16 %v1237, %v1233
    %v1278 = vpack.c.b16 %v1238, %v1234
    %v1279 = vpack.c.b16 %v1239, %v1235
    %v1280 = vpack.c.b16 %v1240, %v1236
    %v1281 = vpack.c.b16 %v1245, %v1241
    %v1282 = vpack.c.b16 %v1246, %v1242
    %v1283 = vpack.c.b16 %v1247, %v1243
    %v1284 = vpack.c.b16 %v1248, %v1244
    %v1322 = vsel %vm279, %v1139, 0
    %1324 = vmatpush.bf16.msra.mxu0 %v1277
    %1325 = vmatpush.bf16.msra.mxu0 %v1273
    %1326 = vmatpush.bf16.msra.mxu0 %v1269
    %1327 = vmatpush.bf16.msra.mxu0 %v1265
    %1328 = vmatpush.bf16.msra.mxu0 %v1261
    %1329 = vmatpush.bf16.msra.mxu0 %v1257
    %1330 = vmatpush.bf16.msra.mxu0 %v1253
    %1331 = vmatpush.bf16.msra.mxu0 %v1249
    %1332 = vmatmul.bf16.gmra.mxu0 %v1138
    %v1333 = vpop.f32.mrf.mxu0
    %v1334 = vadd.f32 %v1125, %v1333
    %v1335 = vpop.f32.mrf.mxu0
    %v1336 = vadd.f32 %v1130, %v1335
    %1337 = vdwg.mxu0
    %1338 = vmatpush.bf16.msra.mxu0 0
    %1339 = vmatpush.bf16.msra.mxu0 0
    %1340 = vmatpush.bf16.msra.mxu0 0
    %1341 = vmatpush.bf16.msra.mxu0 0
    %1342 = vmatpush.bf16.msra.mxu0 0
    %1343 = vmatpush.bf16.msra.mxu0 0
    %1344 = vmatpush.bf16.msra.mxu0 0
    %1345 = vmatpush.bf16.msra.mxu0 %v1281
    %1346 = vmatmul.bf16.gmra.mxu0 %v1322
    %v1347 = vpop.f32.mrf.mxu0
    %v1348 = vadd.f32 %v1334, %v1347
    %v1349 = vpop.f32.mrf.mxu0
    %v1350 = vadd.f32 %v1336, %v1349
    %1351 = vdwg.mxu0
    %1352 = vmatpush.bf16.msra.mxu0 %v1278
    %1353 = vmatpush.bf16.msra.mxu0 %v1274
    %1354 = vmatpush.bf16.msra.mxu0 %v1270
    %1355 = vmatpush.bf16.msra.mxu0 %v1266
    %1356 = vmatpush.bf16.msra.mxu0 %v1262
    %1357 = vmatpush.bf16.msra.mxu0 %v1258
    %1358 = vmatpush.bf16.msra.mxu0 %v1254
    %1359 = vmatpush.bf16.msra.mxu0 %v1250
    %1360 = vmatmul.bf16.gmra.mxu0 %v1138
    %v1361 = vpop.f32.mrf.mxu0
    %v1362 = vadd.f32 %v1125, %v1361
    %v1363 = vpop.f32.mrf.mxu0
    %v1364 = vadd.f32 %v1130, %v1363
    %1365 = vdwg.mxu0
    %1366 = vmatpush.bf16.msra.mxu0 0
    %1367 = vmatpush.bf16.msra.mxu0 0
    %1368 = vmatpush.bf16.msra.mxu0 0
    %1369 = vmatpush.bf16.msra.mxu0 0
    %1370 = vmatpush.bf16.msra.mxu0 0
    %1371 = vmatpush.bf16.msra.mxu0 0
    %1372 = vmatpush.bf16.msra.mxu0 0
    %1373 = vmatpush.bf16.msra.mxu0 %v1282
    %1374 = vmatmul.bf16.gmra.mxu0 %v1322
    %v1375 = vpop.f32.mrf.mxu0
    %v1376 = vadd.f32 %v1362, %v1375
    %v1377 = vpop.f32.mrf.mxu0
    %v1378 = vadd.f32 %v1364, %v1377
    %1379 = vdwg.mxu0
    %1380 = vmatpush.bf16.msra.mxu0 %v1279
    %1381 = vmatpush.bf16.msra.mxu0 %v1275
    %1382 = vmatpush.bf16.msra.mxu0 %v1271
    %1383 = vmatpush.bf16.msra.mxu0 %v1267
    %1384 = vmatpush.bf16.msra.mxu0 %v1263
    %1385 = vmatpush.bf16.msra.mxu0 %v1259
    %1386 = vmatpush.bf16.msra.mxu0 %v1255
    %1387 = vmatpush.bf16.msra.mxu0 %v1251
    %1388 = vmatmul.bf16.gmra.mxu0 %v1138
    %v1389 = vpop.f32.mrf.mxu0
    %v1390 = vadd.f32 %v1125, %v1389
    %v1391 = vpop.f32.mrf.mxu0
    %v1392 = vadd.f32 %v1130, %v1391
    %1393 = vdwg.mxu0
    %1394 = vmatpush.bf16.msra.mxu0 0
    %1395 = vmatpush.bf16.msra.mxu0 0
    %1396 = vmatpush.bf16.msra.mxu0 0
    %1397 = vmatpush.bf16.msra.mxu0 0
    %1398 = vmatpush.bf16.msra.mxu0 0
    %1399 = vmatpush.bf16.msra.mxu0 0
    %1400 = vmatpush.bf16.msra.mxu0 0
    %1401 = vmatpush.bf16.msra.mxu0 %v1283
    %1402 = vmatmul.bf16.gmra.mxu0 %v1322
    %v1403 = vpop.f32.mrf.mxu0
    %v1404 = vadd.f32 %v1390, %v1403
    %v1405 = vpop.f32.mrf.mxu0
    %v1406 = vadd.f32 %v1392, %v1405
    %1407 = vdwg.mxu0
    %1408 = vmatpush.bf16.msra.mxu0 %v1280
    %1409 = vmatpush.bf16.msra.mxu0 %v1276
    %1410 = vmatpush.bf16.msra.mxu0 %v1272
    %1411 = vmatpush.bf16.msra.mxu0 %v1268
    %1412 = vmatpush.bf16.msra.mxu0 %v1264
    %1413 = vmatpush.bf16.msra.mxu0 %v1260
    %1414 = vmatpush.bf16.msra.mxu0 %v1256
    %1415 = vmatpush.bf16.msra.mxu0 %v1252
    %1416 = vmatmul.bf16.gmra.mxu0 %v1138
    %v1417 = vpop.f32.mrf.mxu0
    %v1418 = vadd.f32 %v1125, %v1417
    %v1419 = vpop.f32.mrf.mxu0
    %v1420 = vadd.f32 %v1130, %v1419
    %1421 = vdwg.mxu0
    %1422 = vmatpush.bf16.msra.mxu0 0
    %1423 = vmatpush.bf16.msra.mxu0 0
    %1424 = vmatpush.bf16.msra.mxu0 0
    %1425 = vmatpush.bf16.msra.mxu0 0
    %1426 = vmatpush.bf16.msra.mxu0 0
    %1427 = vmatpush.bf16.msra.mxu0 0
    %1428 = vmatpush.bf16.msra.mxu0 0
    %1429 = vmatpush.bf16.msra.mxu0 %v1284
    %1430 = vmatmul.bf16.gmra.mxu0 %v1322
    %v1431 = vpop.f32.mrf.mxu0
    %v1432 = vadd.f32 %v1418, %v1431
    %v1433 = vpop.f32.mrf.mxu0
    %v1434 = vadd.f32 %v1420, %v1433
    %1435 = vdwg.mxu0
    %v1436 = vmax.f32 %v1348, 0.0
    %v1437 = vmax.f32 %v1376, 0.0
    %v1438 = vmax.f32 %v1404, 0.0
    %v1439 = vmax.f32 %v1432, 0.0
    %v1440 = vmax.f32 %v1350, 0.0
    %v1441 = vmax.f32 %v1378, 0.0
    %v1442 = vmax.f32 %v1406, 0.0
    %v1443 = vmax.f32 %v1434, 0.0
    %v1444 = vadd.f32 %v1436, %v1437
    %1445 = vadd.xlane.f32.xlu0 %v1444
    %v1446 = vpop.xlane.xlu0 %1445
    %v1447 = vadd.f32 %v1440, %v1441
    %1448 = vadd.xlane.f32.xlu0 %v1447
    %v1449 = vpop.xlane.xlu0 %1448
    %v1450 = vmul.f32 %v1446, 0.00390625
    %v1451 = vmul.f32 %v1449, 0.00390625
    %v1452 = vld [vmem:[#allocation9] sm:$0xff]
    %v1453 = vld [vmem:[#allocation9 + $0x8] sm:$0xff]
    %v1455 = vsel %vm279, %v1452, 0
    %v1458 = vsel %vm279, %v1453, 0
    %1460 = vmatpush.msra.mxu0 0.0
    %1461 = vmatpush.msra.mxu0 0.0
    %1462 = vmatpush.msra.mxu0 0.0
    %1463 = vmatpush.msra.mxu0 0.0
    %1464 = vmatpush.msra.mxu0 0.0
    %1465 = vmatpush.msra.mxu0 0.0
    %1466 = vmatpush.msra.mxu0 0.0
    %1467 = vmatpush.msra.mxu0 0.0
    %1468 = vmatpush.msra.mxu0 0.0
    %1469 = vmatpush.msra.mxu0 0.0
    %1470 = vmatpush.msra.mxu0 0.0
    %1471 = vmatpush.msra.mxu0 0.0
    %1472 = vmatpush.msra.mxu0 0.0
    %1473 = vmatpush.msra.mxu0 0.0
    %1474 = vmatpush.msra.mxu0 %v1451
    %1475 = vmatpush.msra.mxu0 %v1450
    %1476 = vmatmul.f32.gmra.mxu0 %v1455
    %v1477 = vpop.f32.mrf.mxu0
    %v1478 = vadd.f32 0.0, %v1477
    %1479 = vmatmul.f32.gmra.mxu0 %v1458
    %v1480 = vpop.f32.mrf.mxu0
    %v1481 = vadd.f32 0.0, %v1480
    %1482 = vdwg.mxu0
    %v1483 = vxor.u32 %v1478, 2147483648
    %v1484 = vxor.u32 %v1481, 2147483648
    %v1485 = vmul.f32 %v1483, 1.442695
    %v1486 = vpow.pop %v1485
    %v1487 = vmul.f32 %v1484, 1.442695
    %v1488 = vpow.pop %v1487
    %v1489 = vadd.f32 %v1486, 1.0
    %v1490 = vadd.f32 %v1488, 1.0
    %v1491 = vrcp.pop %v1489
    %v1492 = vmul.f32 %v1489, %v1491
    %v1493 = vsub.f32 1.0, %v1492
    %v1494 = vmul.f32 %v1491, %v1493
    %v1495 = vadd.f32 %v1491, %v1494
    %vm1496 = vweird.f32 %v1489
    %vm1497 = vweird.f32 %v1491
    %vm1498 = vmor %vm1496, %vm1497
    %v1499 = vsel %vm1498, %v1491, %v1495
    %v1500 = vand.u32 2147483647, %v1489
    %vm1501 = vcmp.eq.f32.partialorder %v1500, 8.507059e+37
    %v1502 = vand.u32 %v1489, 2147483648
    %v1503 = vor.u32 1.1754944e-38, %v1502
    %v1504 = vsel %vm1501, %v1503, %v1499
    %v1505 = vmul.f32 1.0, %v1504
    %v1506 = vrcp.pop %v1490
    %v1507 = vmul.f32 %v1490, %v1506
    %v1508 = vsub.f32 1.0, %v1507
    %v1509 = vmul.f32 %v1506, %v1508
    %v1510 = vadd.f32 %v1506, %v1509
    %vm1511 = vweird.f32 %v1490
    %vm1512 = vweird.f32 %v1506
    %vm1513 = vmor %vm1511, %vm1512
    %v1514 = vsel %vm1513, %v1506, %v1510
    %v1515 = vand.u32 2147483647, %v1490
    %vm1516 = vcmp.eq.f32.partialorder %v1515, 8.507059e+37
    %v1517 = vand.u32 %v1490, 2147483648
    %v1518 = vor.u32 1.1754944e-38, %v1517
    %v1519 = vsel %vm1516, %v1518, %v1514
    %v1520 = vmul.f32 1.0, %v1519
    %1522 = vset.pattern.permute.xlu0 0
    %1523 = vperm.xlu0 %1522, %v1505
    %v1524 = vpop.permute.xlu0 %1523
    %1527 = vset.pattern.permute.xlu0 0
    %1528 = vperm.xlu0 %1527, %v1520
    %v1529 = vpop.permute.xlu0 %1528
    %v1531 = vmul.f32 %v1436, %v1524
    %v1532 = vmul.f32 %v1437, %v1524
    %v1533 = vmul.f32 %v1440, %v1529
    %v1534 = vmul.f32 %v1441, %v1529
    %1535 = vst [vmem:[#allocation10] sm:$0xff] %v1531
    %1536 = vst [vmem:[#allocation10 + $0x8] sm:$0xff] %v1532
    %1537 = vst [vmem:[#allocation10 + $0x10] sm:$0xff] %v1533
    %1538 = vst [vmem:[#allocation10 + $0x18] sm:$0xff] %v1534
    %v1539 = vadd.f32 %v1438, %v1439
    %1540 = vadd.xlane.f32.xlu0 %v1539
    %v1541 = vpop.xlane.xlu0 %1540
    %v1542 = vadd.f32 %v1442, %v1443
    %1543 = vadd.xlane.f32.xlu0 %v1542
    %v1544 = vpop.xlane.xlu0 %1543
    %v1545 = vmul.f32 %v1541, 0.00390625
    %v1546 = vmul.f32 %v1544, 0.00390625
    %v1547 = vld [vmem:[#allocation9] sm:$0xff]
    %v1548 = vld [vmem:[#allocation9 + $0x8] sm:$0xff]
    %v1550 = vsel %vm279, %v1547, 0
    %v1553 = vsel %vm279, %v1548, 0
    %1555 = vmatpush.msra.mxu0 0.0
    %1556 = vmatpush.msra.mxu0 0.0
    %1557 = vmatpush.msra.mxu0 0.0
    %1558 = vmatpush.msra.mxu0 0.0
    %1559 = vmatpush.msra.mxu0 0.0
    %1560 = vmatpush.msra.mxu0 0.0
    %1561 = vmatpush.msra.mxu0 0.0
    %1562 = vmatpush.msra.mxu0 0.0
    %1563 = vmatpush.msra.mxu0 0.0
    %1564 = vmatpush.msra.mxu0 0.0
    %1565 = vmatpush.msra.mxu0 0.0
    %1566 = vmatpush.msra.mxu0 0.0
    %1567 = vmatpush.msra.mxu0 0.0
    %1568 = vmatpush.msra.mxu0 0.0
    %1569 = vmatpush.msra.mxu0 %v1546
    %1570 = vmatpush.msra.mxu0 %v1545
    %1571 = vmatmul.f32.gmra.mxu0 %v1550
    %v1572 = vpop.f32.mrf.mxu0
    %v1573 = vadd.f32 0.0, %v1572
    %1574 = vmatmul.f32.gmra.mxu0 %v1553
    %v1575 = vpop.f32.mrf.mxu0
    %v1576 = vadd.f32 0.0, %v1575
    %1577 = vdwg.mxu0
    %v1578 = vxor.u32 %v1573, 2147483648
    %v1579 = vxor.u32 %v1576, 2147483648
    %v1580 = vmul.f32 %v1578, 1.442695
    %v1581 = vpow.pop %v1580
    %v1582 = vmul.f32 %v1579, 1.442695
    %v1583 = vpow.pop %v1582
    %v1584 = vadd.f32 %v1581, 1.0
    %v1585 = vadd.f32 %v1583, 1.0
    %v1586 = vrcp.pop %v1584
    %v1587 = vmul.f32 %v1584, %v1586
    %v1588 = vsub.f32 1.0, %v1587
    %v1589 = vmul.f32 %v1586, %v1588
    %v1590 = vadd.f32 %v1586, %v1589
    %vm1591 = vweird.f32 %v1584
    %vm1592 = vweird.f32 %v1586
    %vm1593 = vmor %vm1591, %vm1592
    %v1594 = vsel %vm1593, %v1586, %v1590
    %v1595 = vand.u32 2147483647, %v1584
    %vm1596 = vcmp.eq.f32.partialorder %v1595, 8.507059e+37
    %v1597 = vand.u32 %v1584, 2147483648
    %v1598 = vor.u32 1.1754944e-38, %v1597
    %v1599 = vsel %vm1596, %v1598, %v1594
    %v1600 = vmul.f32 1.0, %v1599
    %v1601 = vrcp.pop %v1585
    %v1602 = vmul.f32 %v1585, %v1601
    %v1603 = vsub.f32 1.0, %v1602
    %v1604 = vmul.f32 %v1601, %v1603
    %v1605 = vadd.f32 %v1601, %v1604
    %vm1606 = vweird.f32 %v1585
    %vm1607 = vweird.f32 %v1601
    %vm1608 = vmor %vm1606, %vm1607
    %v1609 = vsel %vm1608, %v1601, %v1605
    %v1610 = vand.u32 2147483647, %v1585
    %vm1611 = vcmp.eq.f32.partialorder %v1610, 8.507059e+37
    %v1612 = vand.u32 %v1585, 2147483648
    %v1613 = vor.u32 1.1754944e-38, %v1612
    %v1614 = vsel %vm1611, %v1613, %v1609
    %v1615 = vmul.f32 1.0, %v1614
    %1617 = vset.pattern.permute.xlu0 0
    %1618 = vperm.xlu0 %1617, %v1600
    %v1619 = vpop.permute.xlu0 %1618
    %1622 = vset.pattern.permute.xlu0 0
    %1623 = vperm.xlu0 %1622, %v1615
    %v1624 = vpop.permute.xlu0 %1623
    %v1626 = vmul.f32 %v1438, %v1619
    %v1627 = vmul.f32 %v1439, %v1619
    %v1628 = vmul.f32 %v1442, %v1624
    %v1629 = vmul.f32 %v1443, %v1624
    %s1630 = scalar_lea.vmem [#allocation10], 32
    %1631 = vst [vmem:[%s1630] sm:$0xff] %v1626
    %1632 = vst [vmem:[%s1630 + $0x8] sm:$0xff] %v1627
    %1633 = vst [vmem:[%s1630 + $0x10] sm:$0xff] %v1628
    %1634 = vst [vmem:[%s1630 + $0x18] sm:$0xff] %v1629
    // Predicated region
    $region38: #{tpu_custom_call.1} parent=1 // pred_check
      _
    $region39: #{tpu_custom_call.1} parent=1 // pred_check_branch
      %1636 = sbr.rel (0) target = $region41
    $region40: #{tpu_custom_call.1} parent=1 // pred_region
      %1638 = vsyncadd [#allocation6], 0
      %s1639 = sshll.u32 [#allocation10], 4
      %s1640 = int_to_ptr.vmem [resolvable:$true] %s1639
      %s1641 = sshll.u32 %s6, 4
      %s1642 = int_to_ptr.hbm [resolvable:$true] %s1641
      %1647 = dma.vmem_to_hbm [thread:$0]  %s1640, 1024, %s1642, [#allocation6], 256, 256, 16
    $region41: #{tpu_custom_call.1} parent=1 // pred_fallthru
      _
    // Predicated region
    $region42: #{tpu_custom_call.1} parent=1 // pred_check
      _
    $region43: #{tpu_custom_call.1} parent=1 // pred_check_branch
      %1649 = sbr.rel (0) target = $region45
    $region44: #{tpu_custom_call.1} parent=1 // pred_region
      %1651 = dma.done [#allocation6], 1024
    $region45: #{tpu_custom_call.1} parent=1 // pred_fallthru
      _
    %1652 = vsyncpa [#allocation5], 1
    %1653 = vsyncpa [#allocation8], 1
    %1654 = vsyncpa [#allocation6], 1

</llo_original>
